<compile_context>
chip_gen: v5e
topology: v5e:2x2
jax: 0.10.0
libtpu: 0.0.40
codegen_flags: <defaults>
</compile_context>

<pallas_src>
import functools
import numpy as np
import jax
import jax.numpy as jnp
from jax import lax
from jax.experimental import pallas as pl
from jax.experimental.pallas import tpu as pltpu


# ---------------------------------------------------------------------------
# Generation-aware VMEM limit
# ---------------------------------------------------------------------------
def _vmem_limit_bytes():
    try:
        cap = pltpu.get_tpu_info().vmem_capacity_bytes
    except Exception:
        cap = 128 * 1024 * 1024
    # leave headroom for double-buffered streamed weights + compiler scratch
    return int(max(32 * 1024 * 1024, min(cap - 16 * 1024 * 1024, 100 * 1024 * 1024)))


# ---------------------------------------------------------------------------
# In-kernel helpers
# ---------------------------------------------------------------------------
def _layer_norm(x, gamma, beta, eps=1e-5):
    # two-pass (centered) variance: robust against cancellation
    mu = jnp.mean(x, axis=-1, keepdims=True)
    xc = x - mu
    var = jnp.mean(xc * xc, axis=-1, keepdims=True)
    return xc * lax.rsqrt(var + eps) * gamma + beta


def _conv1d_taps(y, w_ref, bias, pad, K):
    """1-D conv over time, all K taps fused into ONE matmul.

    y: [T, Cin] f32.  w_ref: Ref[K*Cin, Cout] bf16 (tap-major rows).
    The K time-shifted copies of y are built with pltpu.roll (XLU slot) + edge
    masks, concatenated along lanes to [T, K*Cin], cast to bf16 once and
    contracted against the pre-reshaped weight.
    """
    T = y.shape[0]
    row = lax.broadcasted_iota(jnp.int32, (T, 1), 0)
    taps = []
    for kk in range(K):
        s = pad - kk                       # out[t] needs y[t - s]
        if s == 0:
            ys = y
        else:
            ys = pltpu.roll(y, s % T, axis=0)
            if s > 0:
                ys = jnp.where(row < s, 0.0, ys)
            else:
                ys = jnp.where(row >= T + s, 0.0, ys)
        taps.append(ys)
    stacked = jnp.concatenate(taps, axis=-1).astype(jnp.bfloat16)   # [T, K*Cin]
    return jnp.dot(stacked, w_ref[...],
                   preferred_element_type=jnp.float32) + bias


# ---------------------------------------------------------------------------
# Fused FFT stack kernel (whole Encoder / Decoder layer stack).
# grid = (batch, layer); the activation lives in a persistent f32 VMEM scratch
# across the layer axis, per-layer weights are streamed by the layer axis.
# Per layer (pre-LN, matches FFTBlockPLN):
#   LN1 -> MHA -> +skip -> LN2 -> *mask -> conv-FFN -> +skip -> *mask
# ---------------------------------------------------------------------------
def fft_stack_kernel(npm_col_ref, npm_row_ref, x_ref, pos_ref,
                     g1_ref, b1_ref, wqkv_ref, bqkv_ref, wo_ref, bo_ref,
                     g2_ref, b2_ref, w1_ref, cb1_ref, w2_ref, cb2_ref,
                     out_ref, acc_ref,
                     *, n_head, d_k, k1, k2, pad1, pad2, kv_tile):
    layer = pl.program_id(1)

    @pl.when(layer == 0)
    def _():
        # fused embedding / positional add (saves one [T, D] HBM pass in XLA)
        acc_ref[...] = x_ref[...] + pos_ref[...]

    x = acc_ref[...]                               # [T, D] f32, VMEM-resident
    T, D = x.shape
    npm = npm_col_ref[...]                         # [T, 1] f32 non-pad mask
    key_pad = npm_row_ref[...] < 0.5               # [1, T] bool, True where PAD
    HD = n_head * d_k

    # ---- pre-LN + multi-head self-attention (online softmax over kv chunks) ----
    xn = _layer_norm(x, g1_ref[...], b1_ref[...])
    # NOTE: the 1/sqrt(d_k) softmax scale is folded into the Q columns of wqkv.
    qkv = jnp.dot(xn.astype(jnp.bfloat16), wqkv_ref[...],
                  preferred_element_type=jnp.float32) + bqkv_ref[...]   # [T, 3HD]
    qkv16 = qkv.astype(jnp.bfloat16)                                    # one cast
    qh = jnp.stack([qkv16[:, h * d_k:(h + 1) * d_k] for h in range(n_head)], 0)
    kh = jnp.stack([qkv16[:, HD + h * d_k:HD + (h + 1) * d_k] for h in range(n_head)], 0)
    vh = jnp.stack([qkv16[:, 2 * HD + h * d_k:2 * HD + (h + 1) * d_k] for h in range(n_head)], 0)

    m_i = jnp.full((n_head, T, 1), -jnp.inf, jnp.float32)
    l_i = jnp.zeros((n_head, T, 1), jnp.float32)
    acc = jnp.zeros((n_head, T, d_k), jnp.float32)
    for c0 in range(0, T, kv_tile):                # static unrolled flash loop
        c1 = min(c0 + kv_tile, T)
        s = jnp.einsum('hqd,hkd->hqk', qh, kh[:, c0:c1, :],
                       preferred_element_type=jnp.float32)       # [H, T, c] f32
        s = jnp.where(key_pad[None, :, c0:c1], -1e9, s)          # key-pad mask
        m_new = jnp.maximum(m_i, jnp.max(s, axis=-1, keepdims=True))
        alpha = jnp.exp(m_i - m_new)
        p = jnp.exp(s - m_new)
        l_i = alpha * l_i + jnp.sum(p, axis=-1, keepdims=True)
        acc = alpha * acc + jnp.einsum('hqk,hkd->hqd', p.astype(jnp.bfloat16),
                                       vh[:, c0:c1, :],
                                       preferred_element_type=jnp.float32)
        m_i = m_new
    ctx = acc * pl.reciprocal(l_i, approx=True)                      # [H, T, dk]
    ctx2d = jnp.concatenate([ctx[h] for h in range(n_head)], axis=-1)  # [T, HD]
    # single output projection with K = HD (replaces per-head einsum + head sum)
    attn = jnp.dot(ctx2d.astype(jnp.bfloat16), wo_ref[...],
                   preferred_element_type=jnp.float32) + bo_ref[...]   # [T, D]

    skip2 = x + attn

    # ---- pre-LN + positionwise conv FFN (taps fused into one matmul each) ----
    y = _layer_norm(skip2, g2_ref[...], b2_ref[...]) * npm
    h1 = jnp.maximum(_conv1d_taps(y, w1_ref, cb1_ref[...], pad1, k1), 0.0)
    h2 = _conv1d_taps(h1, w2_ref, cb2_ref[...], pad2, k2)

    acc_ref[...] = (h2 + skip2) * npm

    @pl.when(layer == pl.num_programs(1) - 1)
    def _():
        out_ref[...] = acc_ref[...].astype(out_ref.dtype)


def fused_fft_stack(x, pos, npm_col, npm_row, W, n_head, k1, k2, pad1, pad2,
                    out_dtype=jnp.float32):
    B, T, D = x.shape
    n_layers = W['g1'].shape[0]
    d_k = D // n_head
    kv_tile = min(T, 512)
    kern = functools.partial(fft_stack_kernel, n_head=n_head, d_k=d_k,
                             k1=k1, k2=k2, pad1=pad1, pad2=pad2, kv_tile=kv_tile)

    def wspec(a):   # stacked per-layer weight: stream one layer per grid step
        nz = a.ndim - 1
        return pl.BlockSpec((None,) + a.shape[1:],
                            lambda b, l, _n=nz: (l,) + (0,) * _n)

    wkeys = ['g1', 'b1', 'wqkv', 'bqkv', 'wo', 'bo',
             'g2', 'b2', 'w1', 'cb1', 'w2', 'cb2']
    in_specs = [
        pl.BlockSpec((None, T, 1), lambda b, l: (b, 0, 0)),   # non-pad mask (col)
        pl.BlockSpec((None, 1, T), lambda b, l: (b, 0, 0)),   # non-pad mask (row)
        pl.BlockSpec((None, T, D), lambda b, l: (b, 0, 0)),   # input activations
        pl.BlockSpec((None, T, D), lambda b, l: (b, 0, 0)),   # positional add
    ] + [wspec(W[k]) for k in wkeys]

    # TODO(synk): add a q-tile parallel grid axis (flash over q as well) so a
    # single utterance can be split across v7x's two TensorCores.
    return pl.pallas_call(
        kern,
        out_shape=jax.ShapeDtypeStruct((B, T, D), out_dtype),
        grid=(B, n_layers),
        in_specs=in_specs,
        out_specs=pl.BlockSpec((None, T, D), lambda b, l: (b, 0, 0)),
        scratch_shapes=[pltpu.VMEM((T, D), jnp.float32)],
        compiler_params=pltpu.CompilerParams(
            dimension_semantics=("parallel", "arbitrary"),
            vmem_limit_bytes=_vmem_limit_bytes()),
    )(npm_col, npm_row, x, pos, *[W[k] for k in wkeys])


# ---------------------------------------------------------------------------
# Duration predictor (Variance_adaptor):
# conv1d -> LN -> ReLU -> conv1d -> LN -> ReLU -> Linear(F->1) -> ReLU
# Output emitted lane-dense as [B, 1, T].
# ---------------------------------------------------------------------------
def duration_predictor_kernel(x_ref, w1_ref, b1_ref, g1_ref, be1_ref,
                              w2_ref, b2_ref, g2_ref, be2_ref,
                              wl_ref, bl_ref, out_ref, *, pad, K):
    x = x_ref[...]                                                   # [T, D]
    h = _conv1d_taps(x, w1_ref, b1_ref[...], pad, K)                 # [T, F]
    h = jnp.maximum(_layer_norm(h, g1_ref[...], be1_ref[...]), 0.0)
    h2 = _conv1d_taps(h, w2_ref, b2_ref[...], pad, K)                # [T, F]
    h2 = jnp.maximum(_layer_norm(h2, g2_ref[...], be2_ref[...]), 0.0)
    # F -> 1 projection, emitted lane-dense as [1, T]
    d = lax.dot_general(wl_ref[...], h2, (((1,), (1,)), ((), ())),
                        preferred_element_type=jnp.float32) + bl_ref[...]
    out_ref[...] = jnp.maximum(d, 0.0).astype(out_ref.dtype)


def duration_predictor_forward(dp, x, cfg):
    B, T, D = x.shape
    K = cfg['duration_predictor_kernel_size']
    kern = functools.partial(duration_predictor_kernel, pad=1, K=K)  # module hard-codes padding=1
    full = lambda a: pl.BlockSpec(a.shape, lambda b, _n=a.ndim: (0,) * _n)
    in_specs = [pl.BlockSpec((None, T, D), lambda b: (b, 0, 0)),
                full(dp['w1']), full(dp['b1']), full(dp['g1']), full(dp['be1']),
                full(dp['w2']), full(dp['b2']), full(dp['g2']), full(dp['be2']),
                full(dp['wl']), full(dp['bl'])]
    out = pl.pallas_call(
        kern,
        out_shape=jax.ShapeDtypeStruct((B, 1, T), jnp.float32),
        grid=(B,),
        in_specs=in_specs,
        out_specs=pl.BlockSpec((None, 1, T), lambda b: (b, 0, 0)),
        compiler_params=pltpu.CompilerParams(dimension_semantics=("parallel",)),
    )(x, dp['w1'], dp['b1'], dp['g1'], dp['be1'],
      dp['w2'], dp['b2'], dp['g2'], dp['be2'], dp['wl'], dp['bl'])
    return out[:, 0, :]                 # [B, T] log-durations


# ---------------------------------------------------------------------------
# Length-regulator expansion: vectorized in-kernel one-hot gather, tiled over
# the mel axis (no per-row serial copy loop, no SMEM index table).
# TODO(synk): switch to a dynamic row gather (jnp.take / tpu dynamic_gather)
# once arbitrary-length sublane gathers lower; the one-hot matmul is MXU-bound.
# ---------------------------------------------------------------------------
def expand_rows_kernel(x_ref, idx_ref, o_ref):
    T = x_ref.shape[0]
    idx = idx_ref[...]                                            # [tl, 1] int32
    cols = lax.broadcasted_iota(jnp.int32, (idx.shape[0], T), 1)  # [tl, T]
    onehot = (idx == cols).astype(jnp.float32)                    # exact 0/1 select
    o_ref[...] = jnp.dot(onehot, x_ref[...],
                         preferred_element_type=jnp.float32).astype(o_ref.dtype)


def expand_rows(x, idx3):
    """output[b, m, :] = x[b, idx3[b, m, 0], :]."""
    B, T, D = x.shape
    Lp = idx3.shape[1]
    tl = min(512, Lp)
    return pl.pallas_call(
        expand_rows_kernel,
        out_shape=jax.ShapeDtypeStruct((B, Lp, D), jnp.float32),
        grid=(B, Lp // tl),
        in_specs=[pl.BlockSpec((None, T, D), lambda b, l: (b, 0, 0)),
                  pl.BlockSpec((None, tl, 1), lambda b, l: (b, l, 0))],
        out_specs=pl.BlockSpec((None, tl, D), lambda b, l: (b, l, 0)),
        compiler_params=pltpu.CompilerParams(
            dimension_semantics=("parallel", "parallel")),
    )(x, idx3)


# ---------------------------------------------------------------------------
# Batched linear (mel projection), tiled over time for pipelining / megacore
# ---------------------------------------------------------------------------
def linear_kernel(x_ref, w_ref, b_ref, o_ref):
    o_ref[...] = (jnp.dot(x_ref[...].astype(jnp.bfloat16), w_ref[...],
                          preferred_element_type=jnp.float32)
                  + b_ref[...]).astype(o_ref.dtype)


def batched_linear(x, w, b):
    B, T, D = x.shape
    N = w.shape[1]
    tt = min(512, T)
    assert T % tt == 0
    return pl.pallas_call(
        linear_kernel,
        out_shape=jax.ShapeDtypeStruct((B, T, N), jnp.float32),
        grid=(B, T // tt),
        in_specs=[pl.BlockSpec((None, tt, D), lambda i, t: (i, t, 0)),
                  pl.BlockSpec((D, N), lambda i, t: (0, 0)),
                  pl.BlockSpec((1, N), lambda i, t: (0, 0))],
        out_specs=pl.BlockSpec((None, tt, N), lambda i, t: (i, t, 0)),
        compiler_params=pltpu.CompilerParams(
            dimension_semantics=("parallel", "parallel")),
    )(x, w, b)


# ---------------------------------------------------------------------------
# Plain-JAX glue (masks, embedding lookups, length-regulator index math)
# ---------------------------------------------------------------------------
def _pad_masks(seq, PAD):
    valid = (seq != PAD).astype(jnp.float32)         # [B, T]
    return valid[:, :, None], valid[:, None, :]      # [B,T,1], [B,1,T]


def _static_mel_len(cfg):
    Lp = -(-max(int(cfg['max_mel_len']), 8) // 8) * 8
    if Lp > 512:
        Lp = -(-Lp // 512) * 512
    return Lp


def encoder_forward(P, src_seq, src_pos, cfg):
    npm_col, npm_row = _pad_masks(src_seq, cfg['PAD'])
    x = P['src_word_emb'][src_seq]
    pos = P['enc_pos_emb'][src_pos]
    k1, k2 = cfg['fft_conv1d_kernel']
    pad1, pad2 = cfg['fft_conv1d_padding']
    out = fused_fft_stack(x, pos, npm_col, npm_row, P['enc_stack'],
                          cfg['encoder_head'], k1, k2, pad1, pad2, jnp.float32)
    return out, npm_col


def decoder_forward(P, enc_seq, mel_pos, cfg):
    npm_col, npm_row = _pad_masks(mel_pos, cfg['PAD'])
    pos = P['dec_pos_emb'][mel_pos]
    k1, k2 = cfg['fft_conv1d_kernel']
    pad1, pad2 = cfg['fft_conv1d_padding']
    # decoder stack output emitted bf16 (feeds bf16 mel matmul; halves traffic)
    return fused_fft_stack(enc_seq, pos, npm_col, npm_row, P['dec_stack'],
                           cfg['decoder_head'], k1, k2, pad1, pad2, jnp.bfloat16)


def length_regulator_forward(P, x, cfg, alpha=1.0):
    B, T, _ = x.shape
    log_dur = duration_predictor_forward(P['dp'], x, cfg)             # [B, T]
    durations = jnp.maximum(
        jnp.floor(jnp.expm1(log_dur) * alpha + 0.5), 0.0).astype(jnp.int32)
    totals = jnp.sum(durations, axis=-1)                              # [B]
    Lp = _static_mel_len(cfg)                                         # static -> no host sync
    csum = jnp.cumsum(durations, axis=-1)                             # [B, T]
    frames = jnp.arange(Lp, dtype=jnp.int32)                          # [Lp]
    # searchsorted avoids materializing a [B, Lp, T] compare tensor
    idx = jax.vmap(lambda c: jnp.searchsorted(c, frames, side='right'))(csum)
    idx = jnp.minimum(idx, T - 1).astype(jnp.int32)                   # [B, Lp]
    output = expand_rows(x, idx[:, :, None])                          # [B, Lp, D]
    mel_pos = jnp.where(frames[None, :] < totals[:, None],
                        frames[None, :] + 1, 0)                       # 0 == PAD
    # TODO(synk): clamp diverges from PyTorch's hard error when the expanded
    # length exceeds the positional-embedding table.
    mel_pos = jnp.minimum(mel_pos, cfg['max_seq_len']).astype(jnp.int32)
    return output, mel_pos, totals


def fastspeech1_forward(P, batch, cfg, alpha=1.0):
    # inference (eval) branch of FastSpeech1.forward
    x, _ = encoder_forward(P, batch['text'], batch['src_pos'], cfg)
    output, mel_pos, totals = length_regulator_forward(P, x, cfg, alpha)
    output = decoder_forward(P, output, mel_pos, cfg)
    mel = batched_linear(output, P['mel_w'], P['mel_b'])               # [B, Lp, 128]
    # All device work is dispatched by now; a single host read of the expanded
    # length slices the padded mel back to the reference output shape.
    L = int(jax.device_get(jnp.max(totals)))
    L = max(min(L, mel.shape[1]), 1)
    return mel[:, :L, :cfg['num_mels']]


# ---------------------------------------------------------------------------
# Deterministic parameter initialization (shapes follow the module __init__;
# matmul weights stored bf16 with conv taps / attention scale pre-folded).
# ---------------------------------------------------------------------------
def init_params(key, cfg):
    keys = iter(jax.random.split(key, 256))
    s = 0.02

    def nrm(shape, dtype=jnp.float32):
        return (s * jax.random.normal(next(keys), shape, jnp.float32)).astype(dtype)

    P = {}
    P['src_word_emb'] = nrm((cfg['vocab_size'], cfg['encoder_dim'])).at[cfg['PAD']].set(0.0)
    P['enc_pos_emb'] = nrm((cfg['max_seq_len'] + 1, cfg['encoder_dim'])).at[cfg['PAD']].set(0.0)
    P['dec_pos_emb'] = nrm((cfg['max_seq_len'] + 1, cfg['decoder_dim'])).at[cfg['PAD']].set(0.0)

    def fft_layer(d_model, d_inner, n_head, k1, k2):
        d_k = d_model // n_head
        HD = n_head * d_k
        wqkv = s * jax.random.normal(next(keys), (d_model, 3 * HD), jnp.float32)
        # fold the 1/sqrt(d_k) softmax scale into the Q projection (bias is 0
        # here; a nonzero Q bias would be scaled identically)
        wqkv = wqkv.at[:, :HD].multiply(1.0 / float(d_k) ** 0.5)
        return dict(
            g1=jnp.ones((1, d_model), jnp.float32), b1=jnp.zeros((1, d_model), jnp.float32),
            wqkv=wqkv.astype(jnp.bfloat16), bqkv=jnp.zeros((1, 3 * HD), jnp.float32),
            wo=nrm((HD, d_model), jnp.bfloat16), bo=jnp.zeros((1, d_model), jnp.float32),
            g2=jnp.ones((1, d_model), jnp.float32), b2=jnp.zeros((1, d_model), jnp.float32),
            # conv weights pre-reshaped tap-major: [K*Cin, Cout]
            w1=nrm((k1 * d_model, d_inner), jnp.bfloat16), cb1=jnp.zeros((1, d_inner), jnp.float32),
            w2=nrm((k2 * d_inner, d_model), jnp.bfloat16), cb2=jnp.zeros((1, d_model), jnp.float32),
        )

    def stack(layers):
        return {k: jnp.stack([lyr[k] for lyr in layers], 0) for k in layers[0]}

    k1, k2 = cfg['fft_conv1d_kernel']
    P['enc_stack'] = stack([fft_layer(cfg['encoder_dim'], cfg['encoder_conv1d_filter_size'],
                                      cfg['encoder_head'], k1, k2)
                            for _ in range(cfg['encoder_n_layer'])])
    P['dec_stack'] = stack([fft_layer(cfg['decoder_dim'], cfg['decoder_conv1d_filter_size'],
                                      cfg['decoder_head'], k1, k2)
                            for _ in range(cfg['decoder_n_layer'])])

    F = cfg['duration_predictor_filter_size']
    K = cfg['duration_predictor_kernel_size']
    Din = cfg['encoder_dim']
    P['dp'] = dict(
        w1=nrm((K * Din, F), jnp.bfloat16), b1=jnp.zeros((1, F), jnp.float32),
        g1=jnp.ones((1, F), jnp.float32), be1=jnp.zeros((1, F), jnp.float32),
        w2=nrm((K * F, F), jnp.bfloat16), b2=jnp.zeros((1, F), jnp.float32),
        g2=jnp.ones((1, F), jnp.float32), be2=jnp.zeros((1, F), jnp.float32),
        wl=nrm((1, F)), bl=jnp.ones((1, 1), jnp.float32),  # bias=1 -> predicted durations ~2
    )

    Npad = max(128, -(-cfg['num_mels'] // 128) * 128)      # lane-dense mel output
    mel_w = jnp.zeros((cfg['decoder_dim'], Npad), jnp.float32)
    mel_w = mel_w.at[:, :cfg['num_mels']].set(
        s * jax.random.normal(next(keys), (cfg['decoder_dim'], cfg['num_mels']), jnp.float32))
    P['mel_w'] = mel_w.astype(jnp.bfloat16)
    P['mel_b'] = jnp.zeros((1, Npad), jnp.float32)
    return P


# ---------------------------------------------------------------------------
if __name__ == "__main__":
    cfg = dict(
        vocab_size=32, max_seq_len=64, PAD=0,
        encoder_dim=32, encoder_n_layer=2, encoder_head=2, encoder_conv1d_filter_size=64,
        decoder_dim=32, decoder_n_layer=2, decoder_head=2, decoder_conv1d_filter_size=64,
        fft_conv1d_kernel=(3, 3), fft_conv1d_padding=(1, 1),
        duration_predictor_filter_size=32, duration_predictor_kernel_size=3,
        duration_predictor_dropout=0.1, dropout=0.1, num_mels=16,
        max_mel_len=64,     # static padded mel length (no mid-pipeline host sync)
    )
    key = jax.random.PRNGKey(0)
    pkey, dkey = jax.random.split(key)
    params = init_params(pkey, cfg)

    B, T = 1, 8   # eval branch of Variance_adaptor (squeeze + unsqueeze(0)) implies batch == 1
    text = jax.random.randint(dkey, (B, T), 1, cfg['vocab_size'], dtype=jnp.int32)
    src_pos = jnp.arange(1, T + 1, dtype=jnp.int32)[None, :]
    batch = {'text': text, 'src_pos': src_pos}

    mel = fastspeech1_forward(params, batch, cfg, alpha=1.0)
    mel = jax.block_until_ready(mel)
    assert np.all(np.isfinite(np.asarray(mel)))
    print("KERNEL_OK")
</pallas_src>

<mosaic_0001>
module attributes {stable_mosaic.version = 11 : i64} {
  func.func @fft_stack_kernel(%arg0: i32, %arg1: i32, %arg2: memref<1x8x1xf32, #tpu.memory_space<vmem>>, %arg3: memref<1x1x8xf32, #tpu.memory_space<vmem>>, %arg4: memref<1x8x32xf32, #tpu.memory_space<vmem>>, %arg5: memref<1x8x32xf32, #tpu.memory_space<vmem>>, %arg6: memref<1x1x32xf32, #tpu.memory_space<vmem>>, %arg7: memref<1x1x32xf32, #tpu.memory_space<vmem>>, %arg8: memref<1x32x96xbf16, #tpu.memory_space<vmem>>, %arg9: memref<1x1x96xf32, #tpu.memory_space<vmem>>, %arg10: memref<1x32x32xbf16, #tpu.memory_space<vmem>>, %arg11: memref<1x1x32xf32, #tpu.memory_space<vmem>>, %arg12: memref<1x1x32xf32, #tpu.memory_space<vmem>>, %arg13: memref<1x1x32xf32, #tpu.memory_space<vmem>>, %arg14: memref<1x96x64xbf16, #tpu.memory_space<vmem>>, %arg15: memref<1x1x64xf32, #tpu.memory_space<vmem>>, %arg16: memref<1x192x32xbf16, #tpu.memory_space<vmem>>, %arg17: memref<1x1x32xf32, #tpu.memory_space<vmem>>, %arg18: memref<1x8x32xf32, #tpu.memory_space<vmem>>, %arg19: memref<8x32xf32, #tpu.memory_space<vmem>>) attributes {dimension_semantics = [#tpu.dimension_semantics<parallel>, #tpu.dimension_semantics<arbitrary>], iteration_bounds = array<i64: 1, 2>, scalar_prefetch = 0 : i64, scratch_operands = 1 : i64, tpu.core_type = #tpu.core_type<tc>, window_params = [{transform_indices = @transform_0, window_bounds = array<i64: 1, 8, 1>}, {transform_indices = @transform_1, window_bounds = array<i64: 1, 1, 8>}, {transform_indices = @transform_2, window_bounds = array<i64: 1, 8, 32>}, {transform_indices = @transform_3, window_bounds = array<i64: 1, 8, 32>}, {transform_indices = @transform_4, window_bounds = array<i64: 1, 1, 32>}, {transform_indices = @transform_5, window_bounds = array<i64: 1, 1, 32>}, {transform_indices = @transform_6, window_bounds = array<i64: 1, 32, 96>}, {transform_indices = @transform_7, window_bounds = array<i64: 1, 1, 96>}, {transform_indices = @transform_8, window_bounds = array<i64: 1, 32, 32>}, {transform_indices = @transform_9, window_bounds = array<i64: 1, 1, 32>}, {transform_indices = @transform_10, window_bounds = array<i64: 1, 1, 32>}, {transform_indices = @transform_11, window_bounds = array<i64: 1, 1, 32>}, {transform_indices = @transform_12, window_bounds = array<i64: 1, 96, 64>}, {transform_indices = @transform_13, window_bounds = array<i64: 1, 1, 64>}, {transform_indices = @transform_14, window_bounds = array<i64: 1, 192, 32>}, {transform_indices = @transform_15, window_bounds = array<i64: 1, 1, 32>}, {transform_indices = @transform_16, window_bounds = array<i64: 1, 8, 32>}]} {
    %c0_i32 = arith.constant 0 : i32
    %0 = arith.cmpi eq, %arg1, %c0_i32 : i32
    %1 = arith.extui %0 : i1 to i32
    %c0_i32_0 = arith.constant 0 : i32
    %2 = arith.cmpi ne, %1, %c0_i32_0 : i32
    scf.if %2 {
      %c0_81 = arith.constant 0 : index
      %c0_82 = arith.constant 0 : index
      %c0_83 = arith.constant 0 : index
      %184 = vector.load %arg4[%c0_81, %c0_82, %c0_83] : memref<1x8x32xf32, #tpu.memory_space<vmem>>, vector<1x8x32xf32>
      %185 = vector.shape_cast %184 : vector<1x8x32xf32> to vector<8x32xf32>
      %c0_84 = arith.constant 0 : index
      %c0_85 = arith.constant 0 : index
      %c0_86 = arith.constant 0 : index
      %186 = vector.load %arg5[%c0_84, %c0_85, %c0_86] : memref<1x8x32xf32, #tpu.memory_space<vmem>>, vector<1x8x32xf32>
      %187 = vector.shape_cast %186 : vector<1x8x32xf32> to vector<8x32xf32>
      %188 = arith.addf %185, %187 : vector<8x32xf32>
      %c0_87 = arith.constant 0 : index
      %c0_88 = arith.constant 0 : index
      %189 = vector.load %arg19[%c0_87, %c0_88] : memref<8x32xf32, #tpu.memory_space<vmem>>, vector<8x32xf32>
      tpu.vector_store %arg19[%c0_87, %c0_88], %188 {strides = array<i32>} : memref<8x32xf32, #tpu.memory_space<vmem>>, vector<8x32xf32>,
    } else {
    }
    %c0 = arith.constant 0 : index
    %c0_1 = arith.constant 0 : index
    %3 = vector.load %arg19[%c0, %c0_1] : memref<8x32xf32, #tpu.memory_space<vmem>>, vector<8x32xf32>
    %c0_2 = arith.constant 0 : index
    %c0_3 = arith.constant 0 : index
    %c0_4 = arith.constant 0 : index
    %4 = vector.load %arg2[%c0_2, %c0_3, %c0_4] : memref<1x8x1xf32, #tpu.memory_space<vmem>>, vector<1x8x1xf32>
    %5 = vector.shape_cast %4 : vector<1x8x1xf32> to vector<8x1xf32>
    %c0_5 = arith.constant 0 : index
    %c0_6 = arith.constant 0 : index
    %c0_7 = arith.constant 0 : index
    %6 = vector.load %arg3[%c0_5, %c0_6, %c0_7] : memref<1x1x8xf32, #tpu.memory_space<vmem>>, vector<1x1x8xf32>
    %7 = vector.shape_cast %6 : vector<1x1x8xf32> to vector<1x8xf32>
    %cst = arith.constant 5.000000e-01 : f32
    %8 = vector.broadcast %cst : f32 to vector<1x8xf32>
    %9 = arith.cmpf olt, %7, %8 : vector<1x8xf32>
    %c0_8 = arith.constant 0 : index
    %c0_9 = arith.constant 0 : index
    %c0_10 = arith.constant 0 : index
    %10 = vector.load %arg6[%c0_8, %c0_9, %c0_10] : memref<1x1x32xf32, #tpu.memory_space<vmem>>, vector<1x1x32xf32>
    %11 = vector.shape_cast %10 : vector<1x1x32xf32> to vector<1x32xf32>
    %c0_11 = arith.constant 0 : index
    %c0_12 = arith.constant 0 : index
    %c0_13 = arith.constant 0 : index
    %12 = vector.load %arg7[%c0_11, %c0_12, %c0_13] : memref<1x1x32xf32, #tpu.memory_space<vmem>>, vector<1x1x32xf32>
    %13 = vector.shape_cast %12 : vector<1x1x32xf32> to vector<1x32xf32>
    %cst_14 = arith.constant dense<0.000000e+00> : vector<8xf32>
    %14 = vector.multi_reduction <add>, %3, %cst_14 [1] : vector<8x32xf32> to vector<8xf32>
    %15 = vector.shape_cast %14 : vector<8xf32> to vector<8x1xf32>
    %cst_15 = arith.constant 3.200000e+01 : f32
    %16 = vector.broadcast %cst_15 : f32 to vector<8x1xf32>
    %17 = arith.divf %15, %16 : vector<8x1xf32>
    %18 = vector.broadcast %17 : vector<8x1xf32> to vector<8x32xf32>
    %19 = arith.subf %3, %18 : vector<8x32xf32>
    %20 = arith.mulf %19, %19 : vector<8x32xf32>
    %cst_16 = arith.constant dense<0.000000e+00> : vector<8xf32>
    %21 = vector.multi_reduction <add>, %20, %cst_16 [1] : vector<8x32xf32> to vector<8xf32>
    %22 = vector.shape_cast %21 : vector<8xf32> to vector<8x1xf32>
    %cst_17 = arith.constant 3.200000e+01 : f32
    %23 = vector.broadcast %cst_17 : f32 to vector<8x1xf32>
    %24 = arith.divf %22, %23 : vector<8x1xf32>
    %cst_18 = arith.constant 9.99999974E-6 : f32
    %25 = vector.broadcast %cst_18 : f32 to vector<8x1xf32>
    %26 = arith.addf %24, %25 : vector<8x1xf32>
    %27 = math.rsqrt %26 : vector<8x1xf32>
    %28 = vector.broadcast %27 : vector<8x1xf32> to vector<8x32xf32>
    %29 = arith.mulf %19, %28 : vector<8x32xf32>
    %30 = vector.broadcast %11 : vector<1x32xf32> to vector<8x32xf32>
    %31 = arith.mulf %29, %30 : vector<8x32xf32>
    %32 = vector.broadcast %13 : vector<1x32xf32> to vector<8x32xf32>
    %33 = arith.addf %31, %32 : vector<8x32xf32>
    %34 = arith.truncf %33 : vector<8x32xf32> to vector<8x32xbf16>
    %c0_19 = arith.constant 0 : index
    %c0_20 = arith.constant 0 : index
    %c0_21 = arith.constant 0 : index
    %35 = vector.load %arg8[%c0_19, %c0_20, %c0_21] : memref<1x32x96xbf16, #tpu.memory_space<vmem>>, vector<1x32x96xbf16>
    %36 = vector.shape_cast %35 : vector<1x32x96xbf16> to vector<32x96xbf16>
    %cst_22 = arith.constant dense<0.000000e+00> : vector<8x96xf32>
    %37 = tpu.matmul %34, %36, %cst_22 {dimension_numbers = #tpu.dot_dimension_numbers<[1], [0], [0], [1], [0, 0, 1, 1], [], []>} : vector<8x32xbf16>, vector<32x96xbf16>, vector<8x96xf32> -> vector<8x96xf32>
    %c0_23 = arith.constant 0 : index
    %c0_24 = arith.constant 0 : index
    %c0_25 = arith.constant 0 : index
    %38 = vector.load %arg9[%c0_23, %c0_24, %c0_25] : memref<1x1x96xf32, #tpu.memory_space<vmem>>, vector<1x1x96xf32>
    %39 = vector.shape_cast %38 : vector<1x1x96xf32> to vector<1x96xf32>
    %40 = vector.broadcast %39 : vector<1x96xf32> to vector<8x96xf32>
    %41 = arith.addf %37, %40 : vector<8x96xf32>
    %42 = arith.truncf %41 : vector<8x96xf32> to vector<8x96xbf16>
    %43 = vector.extract_strided_slice %42 {offsets = [0, 0], sizes = [8, 16], strides = [1, 1]} : vector<8x96xbf16> to vector<8x16xbf16>
    %44 = vector.extract_strided_slice %42 {offsets = [0, 16], sizes = [8, 16], strides = [1, 1]} : vector<8x96xbf16> to vector<8x16xbf16>
    %45 = vector.shape_cast %43 : vector<8x16xbf16> to vector<1x8x16xbf16>
    %46 = vector.shape_cast %44 : vector<8x16xbf16> to vector<1x8x16xbf16>
    %47 = tpu.concatenate %45, %46 in 0 : vector<1x8x16xbf16>, vector<1x8x16xbf16> -> vector<2x8x16xbf16>
    %48 = vector.extract_strided_slice %42 {offsets = [0, 32], sizes = [8, 16], strides = [1, 1]} : vector<8x96xbf16> to vector<8x16xbf16>
    %49 = vector.extract_strided_slice %42 {offsets = [0, 48], sizes = [8, 16], strides = [1, 1]} : vector<8x96xbf16> to vector<8x16xbf16>
    %50 = vector.shape_cast %48 : vector<8x16xbf16> to vector<1x8x16xbf16>
    %51 = vector.shape_cast %49 : vector<8x16xbf16> to vector<1x8x16xbf16>
    %52 = tpu.concatenate %50, %51 in 0 : vector<1x8x16xbf16>, vector<1x8x16xbf16> -> vector<2x8x16xbf16>
    %53 = vector.extract_strided_slice %42 {offsets = [0, 64], sizes = [8, 16], strides = [1, 1]} : vector<8x96xbf16> to vector<8x16xbf16>
    %54 = vector.extract_strided_slice %42 {offsets = [0, 80], sizes = [8, 16], strides = [1, 1]} : vector<8x96xbf16> to vector<8x16xbf16>
    %55 = vector.shape_cast %53 : vector<8x16xbf16> to vector<1x8x16xbf16>
    %56 = vector.shape_cast %54 : vector<8x16xbf16> to vector<1x8x16xbf16>
    %57 = tpu.concatenate %55, %56 in 0 : vector<1x8x16xbf16>, vector<1x8x16xbf16> -> vector<2x8x16xbf16>
    %cst_26 = arith.constant 0xFF800000 : f32
    %58 = vector.broadcast %cst_26 : f32 to vector<2x8x1xf32>
    %cst_27 = arith.constant 0.000000e+00 : f32
    %59 = vector.broadcast %cst_27 : f32 to vector<2x8x1xf32>
    %cst_28 = arith.constant 0.000000e+00 : f32
    %60 = vector.broadcast %cst_28 : f32 to vector<2x8x16xf32>
    "tpu.trace_start"() <{level = 10 : i32, message = "hqd,hkd->hqk"}> : () -> ()
    %cst_29 = arith.constant dense<0.000000e+00> : vector<2x8x8xf32>
    %61 = tpu.matmul %47, %52, %cst_29 {dimension_numbers = #tpu.dot_dimension_numbers<[2], [2], [1], [1], [0, 0, 0, 1, 1, 1], [0], [0]>} : vector<2x8x16xbf16>, vector<2x8x16xbf16>, vector<2x8x8xf32> -> vector<2x8x8xf32>
    "tpu.trace_stop"() : () -> ()
    %62 = vector.shape_cast %9 : vector<1x8xi1> to vector<1x1x8xi1>
    %cst_30 = arith.constant -1.000000e+09 : f32
    %63 = vector.shape_cast %62 : vector<1x1x8xi1> to vector<1x1x8xi1>
    %64 = vector.broadcast %63 : vector<1x1x8xi1> to vector<2x8x8xi1>
    %65 = vector.broadcast %cst_30 : f32 to vector<2x8x8xf32>
    %66 = arith.select %64, %65, %61 : vector<2x8x8xi1>, vector<2x8x8xf32>
    %cst_31 = arith.constant dense<0xFF800000> : vector<2x8xf32>
    %67 = vector.multi_reduction <maximumf>, %66, %cst_31 [2] : vector<2x8x8xf32> to vector<2x8xf32>
    %68 = vector.shape_cast %67 : vector<2x8xf32> to vector<2x8x1xf32>
    %69 = arith.maximumf %58, %68 : vector<2x8x1xf32>
    %70 = arith.subf %58, %69 : vector<2x8x1xf32>
    %71 = math.exp %70 : vector<2x8x1xf32>
    %72 = vector.broadcast %69 : vector<2x8x1xf32> to vector<2x8x8xf32>
    %73 = arith.subf %66, %72 : vector<2x8x8xf32>
    %74 = math.exp %73 : vector<2x8x8xf32>
    %75 = arith.mulf %71, %59 : vector<2x8x1xf32>
    %cst_32 = arith.constant dense<0.000000e+00> : vector<2x8xf32>
    %76 = vector.multi_reduction <add>, %74, %cst_32 [2] : vector<2x8x8xf32> to vector<2x8xf32>
    %77 = vector.shape_cast %76 : vector<2x8xf32> to vector<2x8x1xf32>
    %78 = arith.addf %75, %77 : vector<2x8x1xf32>
    %79 = vector.broadcast %71 : vector<2x8x1xf32> to vector<2x8x16xf32>
    %80 = arith.mulf %79, %60 : vector<2x8x16xf32>
    %81 = arith.truncf %74 : vector<2x8x8xf32> to vector<2x8x8xbf16>
    "tpu.trace_start"() <{level = 10 : i32, message = "hqk,hkd->hqd"}> : () -> ()
    %cst_33 = arith.constant dense<0.000000e+00> : vector<2x8x16xf32>
    %82 = tpu.matmul %81, %57, %cst_33 {dimension_numbers = #tpu.dot_dimension_numbers<[2], [1], [1], [2], [0, 0, 0, 1, 1, 2], [0], [0]>} : vector<2x8x8xbf16>, vector<2x8x16xbf16>, vector<2x8x16xf32> -> vector<2x8x16xf32>
    "tpu.trace_stop"() : () -> ()
    %83 = arith.addf %80, %82 : vector<2x8x16xf32>
    %84 = tpu.reciprocal %78 {approx = true} : vector<2x8x1xf32> -> vector<2x8x1xf32>
    %85 = vector.broadcast %84 : vector<2x8x1xf32> to vector<2x8x16xf32>
    %86 = arith.mulf %83, %85 : vector<2x8x16xf32>
    %87 = vector.extract_strided_slice %86 {offsets = [0, 0, 0], sizes = [1, 8, 16], strides = [1, 1, 1]} : vector<2x8x16xf32> to vector<1x8x16xf32>
    %88 = vector.shape_cast %87 : vector<1x8x16xf32> to vector<8x16xf32>
    %89 = vector.extract_strided_slice %86 {offsets = [1, 0, 0], sizes = [1, 8, 16], strides = [1, 1, 1]} : vector<2x8x16xf32> to vector<1x8x16xf32>
    %90 = vector.shape_cast %89 : vector<1x8x16xf32> to vector<8x16xf32>
    %91 = tpu.concatenate %88, %90 in 1 : vector<8x16xf32>, vector<8x16xf32> -> vector<8x32xf32>
    %92 = arith.truncf %91 : vector<8x32xf32> to vector<8x32xbf16>
    %c0_34 = arith.constant 0 : index
    %c0_35 = arith.constant 0 : index
    %c0_36 = arith.constant 0 : index
    %93 = vector.load %arg10[%c0_34, %c0_35, %c0_36] : memref<1x32x32xbf16, #tpu.memory_space<vmem>>, vector<1x32x32xbf16>
    %94 = vector.shape_cast %93 : vector<1x32x32xbf16> to vector<32x32xbf16>
    %cst_37 = arith.constant dense<0.000000e+00> : vector<8x32xf32>
    %95 = tpu.matmul %92, %94, %cst_37 {dimension_numbers = #tpu.dot_dimension_numbers<[1], [0], [0], [1], [0, 0, 1, 1], [], []>} : vector<8x32xbf16>, vector<32x32xbf16>, vector<8x32xf32> -> vector<8x32xf32>
    %c0_38 = arith.constant 0 : index
    %c0_39 = arith.constant 0 : index
    %c0_40 = arith.constant 0 : index
    %96 = vector.load %arg11[%c0_38, %c0_39, %c0_40] : memref<1x1x32xf32, #tpu.memory_space<vmem>>, vector<1x1x32xf32>
    %97 = vector.shape_cast %96 : vector<1x1x32xf32> to vector<1x32xf32>
    %98 = vector.broadcast %97 : vector<1x32xf32> to vector<8x32xf32>
    %99 = arith.addf %95, %98 : vector<8x32xf32>
    %100 = arith.addf %3, %99 : vector<8x32xf32>
    %c0_41 = arith.constant 0 : index
    %c0_42 = arith.constant 0 : index
    %c0_43 = arith.constant 0 : index
    %101 = vector.load %arg12[%c0_41, %c0_42, %c0_43] : memref<1x1x32xf32, #tpu.memory_space<vmem>>, vector<1x1x32xf32>
    %102 = vector.shape_cast %101 : vector<1x1x32xf32> to vector<1x32xf32>
    %c0_44 = arith.constant 0 : index
    %c0_45 = arith.constant 0 : index
    %c0_46 = arith.constant 0 : index
    %103 = vector.load %arg13[%c0_44, %c0_45, %c0_46] : memref<1x1x32xf32, #tpu.memory_space<vmem>>, vector<1x1x32xf32>
    %104 = vector.shape_cast %103 : vector<1x1x32xf32> to vector<1x32xf32>
    %cst_47 = arith.constant dense<0.000000e+00> : vector<8xf32>
    %105 = vector.multi_reduction <add>, %100, %cst_47 [1] : vector<8x32xf32> to vector<8xf32>
    %106 = vector.shape_cast %105 : vector<8xf32> to vector<8x1xf32>
    %cst_48 = arith.constant 3.200000e+01 : f32
    %107 = vector.broadcast %cst_48 : f32 to vector<8x1xf32>
    %108 = arith.divf %106, %107 : vector<8x1xf32>
    %109 = vector.broadcast %108 : vector<8x1xf32> to vector<8x32xf32>
    %110 = arith.subf %100, %109 : vector<8x32xf32>
    %111 = arith.mulf %110, %110 : vector<8x32xf32>
    %cst_49 = arith.constant dense<0.000000e+00> : vector<8xf32>
    %112 = vector.multi_reduction <add>, %111, %cst_49 [1] : vector<8x32xf32> to vector<8xf32>
    %113 = vector.shape_cast %112 : vector<8xf32> to vector<8x1xf32>
    %cst_50 = arith.constant 3.200000e+01 : f32
    %114 = vector.broadcast %cst_50 : f32 to vector<8x1xf32>
    %115 = arith.divf %113, %114 : vector<8x1xf32>
    %cst_51 = arith.constant 9.99999974E-6 : f32
    %116 = vector.broadcast %cst_51 : f32 to vector<8x1xf32>
    %117 = arith.addf %115, %116 : vector<8x1xf32>
    %118 = math.rsqrt %117 : vector<8x1xf32>
    %119 = vector.broadcast %118 : vector<8x1xf32> to vector<8x32xf32>
    %120 = arith.mulf %110, %119 : vector<8x32xf32>
    %121 = vector.broadcast %102 : vector<1x32xf32> to vector<8x32xf32>
    %122 = arith.mulf %120, %121 : vector<8x32xf32>
    %123 = vector.broadcast %104 : vector<1x32xf32> to vector<8x32xf32>
    %124 = arith.addf %122, %123 : vector<8x32xf32>
    %125 = vector.broadcast %5 : vector<8x1xf32> to vector<8x32xf32>
    %126 = arith.mulf %124, %125 : vector<8x32xf32>
    %c0_52 = arith.constant 0 : index
    %c0_53 = arith.constant 0 : index
    %c0_54 = arith.constant 0 : index
    %127 = vector.load %arg15[%c0_52, %c0_53, %c0_54] : memref<1x1x64xf32, #tpu.memory_space<vmem>>, vector<1x1x64xf32>
    %128 = vector.shape_cast %127 : vector<1x1x64xf32> to vector<1x64xf32>
    %129 = tpu.iota {dimensions = array<i32: 0>} : vector<8x1xi32>
    %c1_i32 = arith.constant 1 : i32
    %130 = tpu.dynamic_rotate %126 by %c1_i32 dim 0 : vector<8x32xf32>, i32 -> vector<8x32xf32>
    %c1_i32_55 = arith.constant 1 : i32
    %131 = vector.broadcast %c1_i32_55 : i32 to vector<8x1xi32>
    %132 = arith.cmpi slt, %129, %131 : vector<8x1xi32>
    %cst_56 = arith.constant 0.000000e+00 : f32
    %133 = vector.shape_cast %132 : vector<8x1xi1> to vector<8x1xi1>
    %134 = vector.broadcast %133 : vector<8x1xi1> to vector<8x32xi1>
    %135 = vector.broadcast %cst_56 : f32 to vector<8x32xf32>
    %136 = arith.select %134, %135, %130 : vector<8x32xi1>, vector<8x32xf32>
    %c7_i32 = arith.constant 7 : i32
    %137 = tpu.dynamic_rotate %126 by %c7_i32 dim 0 : vector<8x32xf32>, i32 -> vector<8x32xf32>
    %c7_i32_57 = arith.constant 7 : i32
    %138 = vector.broadcast %c7_i32_57 : i32 to vector<8x1xi32>
    %139 = arith.cmpi sge, %129, %138 : vector<8x1xi32>
    %cst_58 = arith.constant 0.000000e+00 : f32
    %140 = vector.shape_cast %139 : vector<8x1xi1> to vector<8x1xi1>
    %141 = vector.broadcast %140 : vector<8x1xi1> to vector<8x32xi1>
    %142 = vector.broadcast %cst_58 : f32 to vector<8x32xf32>
    %143 = arith.select %141, %142, %137 : vector<8x32xi1>, vector<8x32xf32>
    %144 = tpu.concatenate %136, %126, %143 in 1 : vector<8x32xf32>, vector<8x32xf32>, vector<8x32xf32> -> vector<8x96xf32>
    %145 = arith.truncf %144 : vector<8x96xf32> to vector<8x96xbf16>
    %c0_59 = arith.constant 0 : index
    %c0_60 = arith.constant 0 : index
    %c0_61 = arith.constant 0 : index
    %146 = vector.load %arg14[%c0_59, %c0_60, %c0_61] : memref<1x96x64xbf16, #tpu.memory_space<vmem>>, vector<1x96x64xbf16>
    %147 = vector.shape_cast %146 : vector<1x96x64xbf16> to vector<96x64xbf16>
    %cst_62 = arith.constant dense<0.000000e+00> : vector<8x64xf32>
    %148 = tpu.matmul %145, %147, %cst_62 {dimension_numbers = #tpu.dot_dimension_numbers<[1], [0], [0], [1], [0, 0, 1, 1], [], []>} : vector<8x96xbf16>, vector<96x64xbf16>, vector<8x64xf32> -> vector<8x64xf32>
    %149 = vector.broadcast %128 : vector<1x64xf32> to vector<8x64xf32>
    %150 = arith.addf %148, %149 : vector<8x64xf32>
    %cst_63 = arith.constant 0.000000e+00 : f32
    %151 = vector.broadcast %cst_63 : f32 to vector<8x64xf32>
    %152 = arith.maximumf %150, %151 : vector<8x64xf32>
    %c0_64 = arith.constant 0 : index
    %c0_65 = arith.constant 0 : index
    %c0_66 = arith.constant 0 : index
    %153 = vector.load %arg17[%c0_64, %c0_65, %c0_66] : memref<1x1x32xf32, #tpu.memory_space<vmem>>, vector<1x1x32xf32>
    %154 = vector.shape_cast %153 : vector<1x1x32xf32> to vector<1x32xf32>
    %155 = tpu.iota {dimensions = array<i32: 0>} : vector<8x1xi32>
    %c1_i32_67 = arith.constant 1 : i32
    %156 = tpu.dynamic_rotate %152 by %c1_i32_67 dim 0 : vector<8x64xf32>, i32 -> vector<8x64xf32>
    %c1_i32_68 = arith.constant 1 : i32
    %157 = vector.broadcast %c1_i32_68 : i32 to vector<8x1xi32>
    %158 = arith.cmpi slt, %155, %157 : vector<8x1xi32>
    %cst_69 = arith.constant 0.000000e+00 : f32
    %159 = vector.shape_cast %158 : vector<8x1xi1> to vector<8x1xi1>
    %160 = vector.broadcast %159 : vector<8x1xi1> to vector<8x64xi1>
    %161 = vector.broadcast %cst_69 : f32 to vector<8x64xf32>
    %162 = arith.select %160, %161, %156 : vector<8x64xi1>, vector<8x64xf32>
    %c7_i32_70 = arith.constant 7 : i32
    %163 = tpu.dynamic_rotate %152 by %c7_i32_70 dim 0 : vector<8x64xf32>, i32 -> vector<8x64xf32>
    %c7_i32_71 = arith.constant 7 : i32
    %164 = vector.broadcast %c7_i32_71 : i32 to vector<8x1xi32>
    %165 = arith.cmpi sge, %155, %164 : vector<8x1xi32>
    %cst_72 = arith.constant 0.000000e+00 : f32
    %166 = vector.shape_cast %165 : vector<8x1xi1> to vector<8x1xi1>
    %167 = vector.broadcast %166 : vector<8x1xi1> to vector<8x64xi1>
    %168 = vector.broadcast %cst_72 : f32 to vector<8x64xf32>
    %169 = arith.select %167, %168, %163 : vector<8x64xi1>, vector<8x64xf32>
    %170 = tpu.concatenate %162, %152, %169 in 1 : vector<8x64xf32>, vector<8x64xf32>, vector<8x64xf32> -> vector<8x192xf32>
    %171 = arith.truncf %170 : vector<8x192xf32> to vector<8x192xbf16>
    %c0_73 = arith.constant 0 : index
    %c0_74 = arith.constant 0 : index
    %c0_75 = arith.constant 0 : index
    %172 = vector.load %arg16[%c0_73, %c0_74, %c0_75] : memref<1x192x32xbf16, #tpu.memory_space<vmem>>, vector<1x192x32xbf16>
    %173 = vector.shape_cast %172 : vector<1x192x32xbf16> to vector<192x32xbf16>
    %cst_76 = arith.constant dense<0.000000e+00> : vector<8x32xf32>
    %174 = tpu.matmul %171, %173, %cst_76 {dimension_numbers = #tpu.dot_dimension_numbers<[1], [0], [0], [1], [0, 0, 1, 1], [], []>} : vector<8x192xbf16>, vector<192x32xbf16>, vector<8x32xf32> -> vector<8x32xf32>
    %175 = vector.broadcast %154 : vector<1x32xf32> to vector<8x32xf32>
    %176 = arith.addf %174, %175 : vector<8x32xf32>
    %177 = arith.addf %176, %100 : vector<8x32xf32>
    %178 = vector.broadcast %5 : vector<8x1xf32> to vector<8x32xf32>
    %179 = arith.mulf %177, %178 : vector<8x32xf32>
    %c0_77 = arith.constant 0 : index
    %c0_78 = arith.constant 0 : index
    %180 = vector.load %arg19[%c0_77, %c0_78] : memref<8x32xf32, #tpu.memory_space<vmem>>, vector<8x32xf32>
    tpu.vector_store %arg19[%c0_77, %c0_78], %179 {strides = array<i32>} : memref<8x32xf32, #tpu.memory_space<vmem>>, vector<8x32xf32>,
    %c1_i32_79 = arith.constant 1 : i32
    %181 = arith.cmpi eq, %arg1, %c1_i32_79 : i32
    %182 = arith.extui %181 : i1 to i32
    %c0_i32_80 = arith.constant 0 : i32
    %183 = arith.cmpi ne, %182, %c0_i32_80 : i32
    scf.if %183 {
      %c0_81 = arith.constant 0 : index
      %c0_82 = arith.constant 0 : index
      %184 = vector.load %arg19[%c0_81, %c0_82] : memref<8x32xf32, #tpu.memory_space<vmem>>, vector<8x32xf32>
      %c0_83 = arith.constant 0 : index
      %c0_84 = arith.constant 0 : index
      %c0_85 = arith.constant 0 : index
      %185 = vector.load %arg18[%c0_83, %c0_84, %c0_85] : memref<1x8x32xf32, #tpu.memory_space<vmem>>, vector<1x8x32xf32>
      %186 = vector.shape_cast %185 : vector<1x8x32xf32> to vector<8x32xf32>
      %187 = vector.shape_cast %184 : vector<8x32xf32> to vector<1x8x32xf32>
      tpu.vector_store %arg18[%c0_83, %c0_84, %c0_85], %187 {strides = array<i32>} : memref<1x8x32xf32, #tpu.memory_space<vmem>>, vector<1x8x32xf32>,
    } else {
    }
    return
  }
  func.func @transform_0(%arg0: i32, %arg1: i32) -> (i32, i32, i32) {
    %c0_i32 = arith.constant 0 : i32
    %c0_i32_0 = arith.constant 0 : i32
    %c0_i32_1 = arith.constant 0 : i32
    return %arg0, %c0_i32, %c0_i32_0 : i32, i32, i32
  }
  func.func @transform_1(%arg0: i32, %arg1: i32) -> (i32, i32, i32) {
    %c0_i32 = arith.constant 0 : i32
    %c0_i32_0 = arith.constant 0 : i32
    %c0_i32_1 = arith.constant 0 : i32
    return %arg0, %c0_i32, %c0_i32_0 : i32, i32, i32
  }
  func.func @transform_2(%arg0: i32, %arg1: i32) -> (i32, i32, i32) {
    %c0_i32 = arith.constant 0 : i32
    %c0_i32_0 = arith.constant 0 : i32
    %c0_i32_1 = arith.constant 0 : i32
    return %arg0, %c0_i32, %c0_i32_0 : i32, i32, i32
  }
  func.func @transform_3(%arg0: i32, %arg1: i32) -> (i32, i32, i32) {
    %c0_i32 = arith.constant 0 : i32
    %c0_i32_0 = arith.constant 0 : i32
    %c0_i32_1 = arith.constant 0 : i32
    return %arg0, %c0_i32, %c0_i32_0 : i32, i32, i32
  }
  func.func @transform_4(%arg0: i32, %arg1: i32) -> (i32, i32, i32) {
    %c0_i32 = arith.constant 0 : i32
    %c0_i32_0 = arith.constant 0 : i32
    %c0_i32_1 = arith.constant 0 : i32
    return %arg1, %c0_i32, %c0_i32_0 : i32, i32, i32
  }
  func.func @transform_5(%arg0: i32, %arg1: i32) -> (i32, i32, i32) {
    %c0_i32 = arith.constant 0 : i32
    %c0_i32_0 = arith.constant 0 : i32
    %c0_i32_1 = arith.constant 0 : i32
    return %arg1, %c0_i32, %c0_i32_0 : i32, i32, i32
  }
  func.func @transform_6(%arg0: i32, %arg1: i32) -> (i32, i32, i32) {
    %c0_i32 = arith.constant 0 : i32
    %c0_i32_0 = arith.constant 0 : i32
    %c0_i32_1 = arith.constant 0 : i32
    return %arg1, %c0_i32, %c0_i32_0 : i32, i32, i32
  }
  func.func @transform_7(%arg0: i32, %arg1: i32) -> (i32, i32, i32) {
    %c0_i32 = arith.constant 0 : i32
    %c0_i32_0 = arith.constant 0 : i32
    %c0_i32_1 = arith.constant 0 : i32
    return %arg1, %c0_i32, %c0_i32_0 : i32, i32, i32
  }
  func.func @transform_8(%arg0: i32, %arg1: i32) -> (i32, i32, i32) {
    %c0_i32 = arith.constant 0 : i32
    %c0_i32_0 = arith.constant 0 : i32
    %c0_i32_1 = arith.constant 0 : i32
    return %arg1, %c0_i32, %c0_i32_0 : i32, i32, i32
  }
  func.func @transform_9(%arg0: i32, %arg1: i32) -> (i32, i32, i32) {
    %c0_i32 = arith.constant 0 : i32
    %c0_i32_0 = arith.constant 0 : i32
    %c0_i32_1 = arith.constant 0 : i32
    return %arg1, %c0_i32, %c0_i32_0 : i32, i32, i32
  }
  func.func @transform_10(%arg0: i32, %arg1: i32) -> (i32, i32, i32) {
    %c0_i32 = arith.constant 0 : i32
    %c0_i32_0 = arith.constant 0 : i32
    %c0_i32_1 = arith.constant 0 : i32
    return %arg1, %c0_i32, %c0_i32_0 : i32, i32, i32
  }
  func.func @transform_11(%arg0: i32, %arg1: i32) -> (i32, i32, i32) {
    %c0_i32 = arith.constant 0 : i32
    %c0_i32_0 = arith.constant 0 : i32
    %c0_i32_1 = arith.constant 0 : i32
    return %arg1, %c0_i32, %c0_i32_0 : i32, i32, i32
  }
  func.func @transform_12(%arg0: i32, %arg1: i32) -> (i32, i32, i32) {
    %c0_i32 = arith.constant 0 : i32
    %c0_i32_0 = arith.constant 0 : i32
    %c0_i32_1 = arith.constant 0 : i32
    return %arg1, %c0_i32, %c0_i32_0 : i32, i32, i32
  }
  func.func @transform_13(%arg0: i32, %arg1: i32) -> (i32, i32, i32) {
    %c0_i32 = arith.constant 0 : i32
    %c0_i32_0 = arith.constant 0 : i32
    %c0_i32_1 = arith.constant 0 : i32
    return %arg1, %c0_i32, %c0_i32_0 : i32, i32, i32
  }
  func.func @transform_14(%arg0: i32, %arg1: i32) -> (i32, i32, i32) {
    %c0_i32 = arith.constant 0 : i32
    %c0_i32_0 = arith.constant 0 : i32
    %c0_i32_1 = arith.constant 0 : i32
    return %arg1, %c0_i32, %c0_i32_0 : i32, i32, i32
  }
  func.func @transform_15(%arg0: i32, %arg1: i32) -> (i32, i32, i32) {
    %c0_i32 = arith.constant 0 : i32
    %c0_i32_0 = arith.constant 0 : i32
    %c0_i32_1 = arith.constant 0 : i32
    return %arg1, %c0_i32, %c0_i32_0 : i32, i32, i32
  }
  func.func @transform_16(%arg0: i32, %arg1: i32) -> (i32, i32, i32) {
    %c0_i32 = arith.constant 0 : i32
    %c0_i32_0 = arith.constant 0 : i32
    %c0_i32_1 = arith.constant 0 : i32
    return %arg0, %c0_i32, %c0_i32_0 : i32, i32, i32
  }
}

</mosaic_0001>

<llo_original>
// kernel: tpu_custom_call.1
$region0: #{tpu_custom_call.1}
  #allocation0 [shape = 'u32[]', space=smem, size = 0x4, offset = 0x4, fixed_abs, tag = 'smem constant byte address 0x4 - core index']
  #allocation1 [shape = 'u32[72,128]{1,0:T(1,128)}', space=vmem, size = 0x9000, scoped, tag = 'internal scratch']
  #allocation2 [shape = 'f32[8,32]{1,0:T(8,128)}', space=vmem, size = 0x1000, scoped, tag = 'scratch operand']
  %s0 = inlined_call_operand.vmem [shape: f32[1,8,1], index: 0, kind: input, shape index: {}]
  %s1 = inlined_call_operand.vmem [shape: f32[1,1,8], index: 1, kind: input, shape index: {}]
  %s2 = inlined_call_operand.vmem [shape: f32[1,8,32], index: 2, kind: input, shape index: {}]
  %s3 = inlined_call_operand.vmem [shape: f32[1,8,32], index: 3, kind: input, shape index: {}]
  %s4 = inlined_call_operand.vmem [shape: f32[2,1,32], index: 4, kind: input, shape index: {}]
  %s5 = inlined_call_operand.vmem [shape: f32[2,1,32], index: 5, kind: input, shape index: {}]
  %s6 = inlined_call_operand.vmem [shape: bf16[2,32,96], index: 6, kind: input, shape index: {}]
  %s7 = inlined_call_operand.vmem [shape: f32[2,1,96], index: 7, kind: input, shape index: {}]
  %s8 = inlined_call_operand.vmem [shape: bf16[2,32,32], index: 8, kind: input, shape index: {}]
  %s9 = inlined_call_operand.vmem [shape: f32[2,1,32], index: 9, kind: input, shape index: {}]
  %s10 = inlined_call_operand.vmem [shape: f32[2,1,32], index: 10, kind: input, shape index: {}]
  %s11 = inlined_call_operand.vmem [shape: f32[2,1,32], index: 11, kind: input, shape index: {}]
  %s12 = inlined_call_operand.vmem [shape: bf16[2,96,64], index: 12, kind: input, shape index: {}]
  %s13 = inlined_call_operand.vmem [shape: f32[2,1,64], index: 13, kind: input, shape index: {}]
  %s14 = inlined_call_operand.vmem [shape: bf16[2,192,32], index: 14, kind: input, shape index: {}]
  %s15 = inlined_call_operand.vmem [shape: f32[2,1,32], index: 15, kind: input, shape index: {}]
  %s16 = inlined_call_operand.hbm [shape: f32[1,8,32], index: 16, kind: output, shape index: {}]
  %s17 = sld [smem:[#allocation0]]
  $region105: #{tpu_custom_call.1} parent=0
    _
  %s19 = ssub.s32 1, %s17
  %s20 = scalar_select 0, %s19, %s17
  $region1: #{tpu_custom_call.1} parent=0
    #allocation3 [shape = 'u8[4096]{0}', space=vmem, size = 0x1000, scoped, tag = 'output window, operand 0, single buffered']
    #allocation4 [shape = 's32[2]{0}', space=sflag, size = 0x8, scoped, tag = 'scoped memory for tpu_custom_call.1']
    %21 = vsyncpa [#allocation4], 0
    loop: start=0, step=1, limit=4
    $region2: #{tpu_custom_call.1} parent=1 // loop_pre_header
      _
    $region3: #{tpu_custom_call.1} parent=1 // loop_header
      %s23 = sphi 0, %s27
      %p24 = scmp.ge.s32.totalorder %s23, 4
      %s30 = sphi 0, %s42
      %s31 = sphi 0, %s38
      %s32 = sphi 0, %s30
      %s33 = sphi 0, %s31
      %s34 = sphi 0, %s32
      %s35 = sphi 0, %s33
      %s45 = sphi 0, %s47
      %s48 = sphi 0, %s45
      %s49 = sphi 0, %s48
      %s65 = sphi 0, %s49
      %s71 = sphi 0, %s73
      %s74 = sphi 0, %s71
      %s75 = sphi 0, %s74
      %s91 = sphi 0, %s75
      %s97 = sphi 0, %s99
      %s100 = sphi 0, %s97
      %s101 = sphi 0, %s100
      %s117 = sphi 0, %s101
      %s123 = sphi 0, %s125
      %s126 = sphi 0, %s123
      %s127 = sphi 0, %s126
      %s143 = sphi 0, %s127
      %s149 = sphi 0, %s151
      %s152 = sphi 0, %s149
      %s153 = sphi 0, %s152
      %s169 = sphi 0, %s153
      %s175 = sphi 0, %s177
      %s178 = sphi 0, %s175
      %s179 = sphi 0, %s178
      %s195 = sphi 0, %s179
      %s201 = sphi 0, %s203
      %s204 = sphi 0, %s201
      %s205 = sphi 0, %s204
      %s221 = sphi 0, %s205
      %s227 = sphi 0, %s229
      %s230 = sphi 0, %s227
      %s231 = sphi 0, %s230
      %s247 = sphi 0, %s231
      %s253 = sphi 0, %s255
      %s256 = sphi 0, %s253
      %s257 = sphi 0, %s256
      %s273 = sphi 0, %s257
      %s279 = sphi 0, %s281
      %s282 = sphi 0, %s279
      %s283 = sphi 0, %s282
      %s299 = sphi 0, %s283
      %s305 = sphi 0, %s307
      %s308 = sphi 0, %s305
      %s309 = sphi 0, %s308
      %s325 = sphi 0, %s309
      %s331 = sphi 0, %s333
      %s334 = sphi 0, %s331
      %s335 = sphi 0, %s334
      %s351 = sphi 0, %s335
      %s357 = sphi 0, %s359
      %s360 = sphi 0, %s357
      %s361 = sphi 0, %s360
      %s377 = sphi 0, %s361
      %s383 = sphi 0, %s385
      %s386 = sphi 0, %s383
      %s387 = sphi 0, %s386
      %s403 = sphi 0, %s387
      %s409 = sphi 0, %s411
      %s412 = sphi 0, %s409
      %s413 = sphi 0, %s412
      %s429 = sphi 0, %s413
      %s435 = sphi 0, %s437
      %s438 = sphi 0, %s435
      %s439 = sphi 0, %s438
      %s455 = sphi 0, %s439
      %s461 = sphi 0, %s463
      %s464 = sphi 0, %s461
      %s465 = sphi 0, %s464
      %s481 = sphi 0, %s465
    $region4: #{tpu_custom_call.1} parent=1 // loop_header_branch
      %26 = sbr.rel (%p24) target = $region8
    $region5: #{tpu_custom_call.1} parent=1 // loop_body
      %s28 = ssub.s32 %s23, 1
      %s29 = ssub.s32 %s23, 2
      %s36 = sadd.s32 1, %s31
      %p37 = scmp.ge.s32.totalorder %s36, 2
      %s38 = scalar_select %p37, 0, %s36
      %s39 = sadd.s32 1, %s30
      %s40 = scalar_select %p37, %s39, %s30
      %p41 = scmp.ge.s32.totalorder %s40, 1
      %s42 = scalar_select %p41, 0, %s40
      %s43 = ssub.s32 %s30, %s42
      %p44 = scmp.eq.s32.totalorder %s43, 0
      %s46 = sadd.s32 %s45, 1
      %s47 = scalar_select %p44, %s45, %s46
      %p50 = pneg %p44
      %p51 = scmp.eq.s32.totalorder %s23, 1
      %p52 = por %p50, %p51
      %p53 = scmp.ne.s32.totalorder %s45, %s48
      %p54 = scmp.eq.s32.totalorder %s23, 0
      %p55 = por %p53, %p54
      %p56 = scmp.ne.s32.totalorder %s45, %s48
      %p57 = scmp.eq.s32.totalorder %s28, 1
      %p58 = por %p56, %p57
      %p59 = scmp.ne.s32.totalorder %s48, %s49
      %p60 = scmp.eq.s32.totalorder %s28, 0
      %p61 = por %p59, %p60
      %p62 = scmp.ne.s32.totalorder %s48, %s49
      %p63 = scmp.eq.s32.totalorder %s29, 1
      %p64 = por %p62, %p63
      %p66 = scmp.ne.s32.totalorder %s49, %s65
      %p67 = scmp.eq.s32.totalorder %s29, 0
      %p68 = por %p66, %p67
      %s69 = ssub.s32 %s30, %s42
      %p70 = scmp.eq.s32.totalorder %s69, 0
      %s72 = sadd.s32 %s71, 1
      %s73 = scalar_select %p70, %s71, %s72
      %p76 = pneg %p70
      %p77 = scmp.eq.s32.totalorder %s23, 1
      %p78 = por %p76, %p77
      %p79 = scmp.ne.s32.totalorder %s71, %s74
      %p80 = scmp.eq.s32.totalorder %s23, 0
      %p81 = por %p79, %p80
      %p82 = scmp.ne.s32.totalorder %s71, %s74
      %p83 = scmp.eq.s32.totalorder %s28, 1
      %p84 = por %p82, %p83
      %p85 = scmp.ne.s32.totalorder %s74, %s75
      %p86 = scmp.eq.s32.totalorder %s28, 0
      %p87 = por %p85, %p86
      %p88 = scmp.ne.s32.totalorder %s74, %s75
      %p89 = scmp.eq.s32.totalorder %s29, 1
      %p90 = por %p88, %p89
      %p92 = scmp.ne.s32.totalorder %s75, %s91
      %p93 = scmp.eq.s32.totalorder %s29, 0
      %p94 = por %p92, %p93
      %s95 = ssub.s32 %s30, %s42
      %p96 = scmp.eq.s32.totalorder %s95, 0
      %s98 = sadd.s32 %s97, 1
      %s99 = scalar_select %p96, %s97, %s98
      %p102 = pneg %p96
      %p103 = scmp.eq.s32.totalorder %s23, 1
      %p104 = por %p102, %p103
      %p105 = scmp.ne.s32.totalorder %s97, %s100
      %p106 = scmp.eq.s32.totalorder %s23, 0
      %p107 = por %p105, %p106
      %p108 = scmp.ne.s32.totalorder %s97, %s100
      %p109 = scmp.eq.s32.totalorder %s28, 1
      %p110 = por %p108, %p109
      %p111 = scmp.ne.s32.totalorder %s100, %s101
      %p112 = scmp.eq.s32.totalorder %s28, 0
      %p113 = por %p111, %p112
      %p114 = scmp.ne.s32.totalorder %s100, %s101
      %p115 = scmp.eq.s32.totalorder %s29, 1
      %p116 = por %p114, %p115
      %p118 = scmp.ne.s32.totalorder %s101, %s117
      %p119 = scmp.eq.s32.totalorder %s29, 0
      %p120 = por %p118, %p119
      %s121 = ssub.s32 %s30, %s42
      %p122 = scmp.eq.s32.totalorder %s121, 0
      %s124 = sadd.s32 %s123, 1
      %s125 = scalar_select %p122, %s123, %s124
      %p128 = pneg %p122
      %p129 = scmp.eq.s32.totalorder %s23, 1
      %p130 = por %p128, %p129
      %p131 = scmp.ne.s32.totalorder %s123, %s126
      %p132 = scmp.eq.s32.totalorder %s23, 0
      %p133 = por %p131, %p132
      %p134 = scmp.ne.s32.totalorder %s123, %s126
      %p135 = scmp.eq.s32.totalorder %s28, 1
      %p136 = por %p134, %p135
      %p137 = scmp.ne.s32.totalorder %s126, %s127
      %p138 = scmp.eq.s32.totalorder %s28, 0
      %p139 = por %p137, %p138
      %p140 = scmp.ne.s32.totalorder %s126, %s127
      %p141 = scmp.eq.s32.totalorder %s29, 1
      %p142 = por %p140, %p141
      %p144 = scmp.ne.s32.totalorder %s127, %s143
      %p145 = scmp.eq.s32.totalorder %s29, 0
      %p146 = por %p144, %p145
      %s147 = ssub.s32 %s31, %s38
      %p148 = scmp.eq.s32.totalorder %s147, 0
      %s150 = sadd.s32 %s149, 1
      %s151 = scalar_select %p148, %s149, %s150
      %p154 = pneg %p148
      %p155 = scmp.eq.s32.totalorder %s23, 1
      %p156 = por %p154, %p155
      %p157 = scmp.ne.s32.totalorder %s149, %s152
      %p158 = scmp.eq.s32.totalorder %s23, 0
      %p159 = por %p157, %p158
      %p160 = scmp.ne.s32.totalorder %s149, %s152
      %p161 = scmp.eq.s32.totalorder %s28, 1
      %p162 = por %p160, %p161
      %p163 = scmp.ne.s32.totalorder %s152, %s153
      %p164 = scmp.eq.s32.totalorder %s28, 0
      %p165 = por %p163, %p164
      %p166 = scmp.ne.s32.totalorder %s152, %s153
      %p167 = scmp.eq.s32.totalorder %s29, 1
      %p168 = por %p166, %p167
      %p170 = scmp.ne.s32.totalorder %s153, %s169
      %p171 = scmp.eq.s32.totalorder %s29, 0
      %p172 = por %p170, %p171
      %s173 = ssub.s32 %s31, %s38
      %p174 = scmp.eq.s32.totalorder %s173, 0
      %s176 = sadd.s32 %s175, 1
      %s177 = scalar_select %p174, %s175, %s176
      %p180 = pneg %p174
      %p181 = scmp.eq.s32.totalorder %s23, 1
      %p182 = por %p180, %p181
      %p183 = scmp.ne.s32.totalorder %s175, %s178
      %p184 = scmp.eq.s32.totalorder %s23, 0
      %p185 = por %p183, %p184
      %p186 = scmp.ne.s32.totalorder %s175, %s178
      %p187 = scmp.eq.s32.totalorder %s28, 1
      %p188 = por %p186, %p187
      %p189 = scmp.ne.s32.totalorder %s178, %s179
      %p190 = scmp.eq.s32.totalorder %s28, 0
      %p191 = por %p189, %p190
      %p192 = scmp.ne.s32.totalorder %s178, %s179
      %p193 = scmp.eq.s32.totalorder %s29, 1
      %p194 = por %p192, %p193
      %p196 = scmp.ne.s32.totalorder %s179, %s195
      %p197 = scmp.eq.s32.totalorder %s29, 0
      %p198 = por %p196, %p197
      %s199 = ssub.s32 %s31, %s38
      %p200 = scmp.eq.s32.totalorder %s199, 0
      %s202 = sadd.s32 %s201, 1
      %s203 = scalar_select %p200, %s201, %s202
      %p206 = pneg %p200
      %p207 = scmp.eq.s32.totalorder %s23, 1
      %p208 = por %p206, %p207
      %p209 = scmp.ne.s32.totalorder %s201, %s204
      %p210 = scmp.eq.s32.totalorder %s23, 0
      %p211 = por %p209, %p210
      %p212 = scmp.ne.s32.totalorder %s201, %s204
      %p213 = scmp.eq.s32.totalorder %s28, 1
      %p214 = por %p212, %p213
      %p215 = scmp.ne.s32.totalorder %s204, %s205
      %p216 = scmp.eq.s32.totalorder %s28, 0
      %p217 = por %p215, %p216
      %p218 = scmp.ne.s32.totalorder %s204, %s205
      %p219 = scmp.eq.s32.totalorder %s29, 1
      %p220 = por %p218, %p219
      %p222 = scmp.ne.s32.totalorder %s205, %s221
      %p223 = scmp.eq.s32.totalorder %s29, 0
      %p224 = por %p222, %p223
      %s225 = ssub.s32 %s31, %s38
      %p226 = scmp.eq.s32.totalorder %s225, 0
      %s228 = sadd.s32 %s227, 1
      %s229 = scalar_select %p226, %s227, %s228
      %p232 = pneg %p226
      %p233 = scmp.eq.s32.totalorder %s23, 1
      %p234 = por %p232, %p233
      %p235 = scmp.ne.s32.totalorder %s227, %s230
      %p236 = scmp.eq.s32.totalorder %s23, 0
      %p237 = por %p235, %p236
      %p238 = scmp.ne.s32.totalorder %s227, %s230
      %p239 = scmp.eq.s32.totalorder %s28, 1
      %p240 = por %p238, %p239
      %p241 = scmp.ne.s32.totalorder %s230, %s231
      %p242 = scmp.eq.s32.totalorder %s28, 0
      %p243 = por %p241, %p242
      %p244 = scmp.ne.s32.totalorder %s230, %s231
      %p245 = scmp.eq.s32.totalorder %s29, 1
      %p246 = por %p244, %p245
      %p248 = scmp.ne.s32.totalorder %s231, %s247
      %p249 = scmp.eq.s32.totalorder %s29, 0
      %p250 = por %p248, %p249
      %s251 = ssub.s32 %s31, %s38
      %p252 = scmp.eq.s32.totalorder %s251, 0
      %s254 = sadd.s32 %s253, 1
      %s255 = scalar_select %p252, %s253, %s254
      %p258 = pneg %p252
      %p259 = scmp.eq.s32.totalorder %s23, 1
      %p260 = por %p258, %p259
      %p261 = scmp.ne.s32.totalorder %s253, %s256
      %p262 = scmp.eq.s32.totalorder %s23, 0
      %p263 = por %p261, %p262
      %p264 = scmp.ne.s32.totalorder %s253, %s256
      %p265 = scmp.eq.s32.totalorder %s28, 1
      %p266 = por %p264, %p265
      %p267 = scmp.ne.s32.totalorder %s256, %s257
      %p268 = scmp.eq.s32.totalorder %s28, 0
      %p269 = por %p267, %p268
      %p270 = scmp.ne.s32.totalorder %s256, %s257
      %p271 = scmp.eq.s32.totalorder %s29, 1
      %p272 = por %p270, %p271
      %p274 = scmp.ne.s32.totalorder %s257, %s273
      %p275 = scmp.eq.s32.totalorder %s29, 0
      %p276 = por %p274, %p275
      %s277 = ssub.s32 %s31, %s38
      %p278 = scmp.eq.s32.totalorder %s277, 0
      %s280 = sadd.s32 %s279, 1
      %s281 = scalar_select %p278, %s279, %s280
      %p284 = pneg %p278
      %p285 = scmp.eq.s32.totalorder %s23, 1
      %p286 = por %p284, %p285
      %p287 = scmp.ne.s32.totalorder %s279, %s282
      %p288 = scmp.eq.s32.totalorder %s23, 0
      %p289 = por %p287, %p288
      %p290 = scmp.ne.s32.totalorder %s279, %s282
      %p291 = scmp.eq.s32.totalorder %s28, 1
      %p292 = por %p290, %p291
      %p293 = scmp.ne.s32.totalorder %s282, %s283
      %p294 = scmp.eq.s32.totalorder %s28, 0
      %p295 = por %p293, %p294
      %p296 = scmp.ne.s32.totalorder %s282, %s283
      %p297 = scmp.eq.s32.totalorder %s29, 1
      %p298 = por %p296, %p297
      %p300 = scmp.ne.s32.totalorder %s283, %s299
      %p301 = scmp.eq.s32.totalorder %s29, 0
      %p302 = por %p300, %p301
      %s303 = ssub.s32 %s31, %s38
      %p304 = scmp.eq.s32.totalorder %s303, 0
      %s306 = sadd.s32 %s305, 1
      %s307 = scalar_select %p304, %s305, %s306
      %p310 = pneg %p304
      %p311 = scmp.eq.s32.totalorder %s23, 1
      %p312 = por %p310, %p311
      %p313 = scmp.ne.s32.totalorder %s305, %s308
      %p314 = scmp.eq.s32.totalorder %s23, 0
      %p315 = por %p313, %p314
      %p316 = scmp.ne.s32.totalorder %s305, %s308
      %p317 = scmp.eq.s32.totalorder %s28, 1
      %p318 = por %p316, %p317
      %p319 = scmp.ne.s32.totalorder %s308, %s309
      %p320 = scmp.eq.s32.totalorder %s28, 0
      %p321 = por %p319, %p320
      %p322 = scmp.ne.s32.totalorder %s308, %s309
      %p323 = scmp.eq.s32.totalorder %s29, 1
      %p324 = por %p322, %p323
      %p326 = scmp.ne.s32.totalorder %s309, %s325
      %p327 = scmp.eq.s32.totalorder %s29, 0
      %p328 = por %p326, %p327
      %s329 = ssub.s32 %s31, %s38
      %p330 = scmp.eq.s32.totalorder %s329, 0
      %s332 = sadd.s32 %s331, 1
      %s333 = scalar_select %p330, %s331, %s332
      %p336 = pneg %p330
      %p337 = scmp.eq.s32.totalorder %s23, 1
      %p338 = por %p336, %p337
      %p339 = scmp.ne.s32.totalorder %s331, %s334
      %p340 = scmp.eq.s32.totalorder %s23, 0
      %p341 = por %p339, %p340
      %p342 = scmp.ne.s32.totalorder %s331, %s334
      %p343 = scmp.eq.s32.totalorder %s28, 1
      %p344 = por %p342, %p343
      %p345 = scmp.ne.s32.totalorder %s334, %s335
      %p346 = scmp.eq.s32.totalorder %s28, 0
      %p347 = por %p345, %p346
      %p348 = scmp.ne.s32.totalorder %s334, %s335
      %p349 = scmp.eq.s32.totalorder %s29, 1
      %p350 = por %p348, %p349
      %p352 = scmp.ne.s32.totalorder %s335, %s351
      %p353 = scmp.eq.s32.totalorder %s29, 0
      %p354 = por %p352, %p353
      %s355 = ssub.s32 %s31, %s38
      %p356 = scmp.eq.s32.totalorder %s355, 0
      %s358 = sadd.s32 %s357, 1
      %s359 = scalar_select %p356, %s357, %s358
      %p362 = pneg %p356
      %p363 = scmp.eq.s32.totalorder %s23, 1
      %p364 = por %p362, %p363
      %p365 = scmp.ne.s32.totalorder %s357, %s360
      %p366 = scmp.eq.s32.totalorder %s23, 0
      %p367 = por %p365, %p366
      %p368 = scmp.ne.s32.totalorder %s357, %s360
      %p369 = scmp.eq.s32.totalorder %s28, 1
      %p370 = por %p368, %p369
      %p371 = scmp.ne.s32.totalorder %s360, %s361
      %p372 = scmp.eq.s32.totalorder %s28, 0
      %p373 = por %p371, %p372
      %p374 = scmp.ne.s32.totalorder %s360, %s361
      %p375 = scmp.eq.s32.totalorder %s29, 1
      %p376 = por %p374, %p375
      %p378 = scmp.ne.s32.totalorder %s361, %s377
      %p379 = scmp.eq.s32.totalorder %s29, 0
      %p380 = por %p378, %p379
      %s381 = ssub.s32 %s31, %s38
      %p382 = scmp.eq.s32.totalorder %s381, 0
      %s384 = sadd.s32 %s383, 1
      %s385 = scalar_select %p382, %s383, %s384
      %p388 = pneg %p382
      %p389 = scmp.eq.s32.totalorder %s23, 1
      %p390 = por %p388, %p389
      %p391 = scmp.ne.s32.totalorder %s383, %s386
      %p392 = scmp.eq.s32.totalorder %s23, 0
      %p393 = por %p391, %p392
      %p394 = scmp.ne.s32.totalorder %s383, %s386
      %p395 = scmp.eq.s32.totalorder %s28, 1
      %p396 = por %p394, %p395
      %p397 = scmp.ne.s32.totalorder %s386, %s387
      %p398 = scmp.eq.s32.totalorder %s28, 0
      %p399 = por %p397, %p398
      %p400 = scmp.ne.s32.totalorder %s386, %s387
      %p401 = scmp.eq.s32.totalorder %s29, 1
      %p402 = por %p400, %p401
      %p404 = scmp.ne.s32.totalorder %s387, %s403
      %p405 = scmp.eq.s32.totalorder %s29, 0
      %p406 = por %p404, %p405
      %s407 = ssub.s32 %s31, %s38
      %p408 = scmp.eq.s32.totalorder %s407, 0
      %s410 = sadd.s32 %s409, 1
      %s411 = scalar_select %p408, %s409, %s410
      %p414 = pneg %p408
      %p415 = scmp.eq.s32.totalorder %s23, 1
      %p416 = por %p414, %p415
      %p417 = scmp.ne.s32.totalorder %s409, %s412
      %p418 = scmp.eq.s32.totalorder %s23, 0
      %p419 = por %p417, %p418
      %p420 = scmp.ne.s32.totalorder %s409, %s412
      %p421 = scmp.eq.s32.totalorder %s28, 1
      %p422 = por %p420, %p421
      %p423 = scmp.ne.s32.totalorder %s412, %s413
      %p424 = scmp.eq.s32.totalorder %s28, 0
      %p425 = por %p423, %p424
      %p426 = scmp.ne.s32.totalorder %s412, %s413
      %p427 = scmp.eq.s32.totalorder %s29, 1
      %p428 = por %p426, %p427
      %p430 = scmp.ne.s32.totalorder %s413, %s429
      %p431 = scmp.eq.s32.totalorder %s29, 0
      %p432 = por %p430, %p431
      %s433 = ssub.s32 %s31, %s38
      %p434 = scmp.eq.s32.totalorder %s433, 0
      %s436 = sadd.s32 %s435, 1
      %s437 = scalar_select %p434, %s435, %s436
      %p440 = pneg %p434
      %p441 = scmp.eq.s32.totalorder %s23, 1
      %p442 = por %p440, %p441
      %p443 = scmp.ne.s32.totalorder %s435, %s438
      %p444 = scmp.eq.s32.totalorder %s23, 0
      %p445 = por %p443, %p444
      %p446 = scmp.ne.s32.totalorder %s435, %s438
      %p447 = scmp.eq.s32.totalorder %s28, 1
      %p448 = por %p446, %p447
      %p449 = scmp.ne.s32.totalorder %s438, %s439
      %p450 = scmp.eq.s32.totalorder %s28, 0
      %p451 = por %p449, %p450
      %p452 = scmp.ne.s32.totalorder %s438, %s439
      %p453 = scmp.eq.s32.totalorder %s29, 1
      %p454 = por %p452, %p453
      %p456 = scmp.ne.s32.totalorder %s439, %s455
      %p457 = scmp.eq.s32.totalorder %s29, 0
      %p458 = por %p456, %p457
      %s459 = ssub.s32 %s30, %s42
      %p460 = scmp.eq.s32.totalorder %s459, 0
      %s462 = sadd.s32 %s461, 1
      %s463 = scalar_select %p460, %s461, %s462
      %p466 = pneg %p460
      %p467 = scmp.eq.s32.totalorder %s23, 1
      %p468 = por %p466, %p467
      %p469 = scmp.ne.s32.totalorder %s461, %s464
      %p470 = scmp.eq.s32.totalorder %s23, 0
      %p471 = por %p469, %p470
      %p472 = scmp.ne.s32.totalorder %s461, %s464
      %p473 = scmp.eq.s32.totalorder %s28, 1
      %p474 = por %p472, %p473
      %p475 = scmp.ne.s32.totalorder %s464, %s465
      %p476 = scmp.eq.s32.totalorder %s28, 0
      %p477 = por %p475, %p476
      %p478 = scmp.ne.s32.totalorder %s464, %s465
      %p479 = scmp.eq.s32.totalorder %s29, 1
      %p480 = por %p478, %p479
      %p482 = scmp.ne.s32.totalorder %s465, %s481
      %p483 = scmp.eq.s32.totalorder %s29, 0
      %p484 = por %p482, %p483
      %p485 = scmp.le.s32.totalorder 1, %s23
      %p486 = scmp.lt.s32.totalorder %s23, 3
      %p487 = pnand %p485, %p486
      %p488 = pneg %p487
      // Predicated region
      $region9: #{tpu_custom_call.1} parent=5 // pred_check
        _
      $region10: #{tpu_custom_call.1} parent=5 // pred_check_branch
        %490 = sbr.rel (%p487) target = $region12
      $region11: #{tpu_custom_call.1} parent=5 // pred_region
        %s491 = ssub.s32 %s23, 1
        // Predicated region
        $region13: #{tpu_custom_call.1} parent=11 // pred_check
          %p492 = pneg %p61
        $region14: #{tpu_custom_call.1} parent=11 // pred_check_branch
          %494 = sbr.rel (%p492) target = $region16
        $region15: #{tpu_custom_call.1} parent=11 // pred_region
          %p495 = scmp.lt.s32.totalorder %s32, 0
          %s496 = scalar_select %p495, %s32, 0
          %s497 = smul.addr %s496, 8
          %s498 = scalar_lea.vmem %s0, %s497
        $region16: #{tpu_custom_call.1} parent=11 // pred_fallthru
          _
        // Predicated region
        $region17: #{tpu_custom_call.1} parent=11 // pred_check
          %p499 = pneg %p87
        $region18: #{tpu_custom_call.1} parent=11 // pred_check_branch
          %501 = sbr.rel (%p499) target = $region20
        $region19: #{tpu_custom_call.1} parent=11 // pred_region
          %p502 = scmp.lt.s32.totalorder %s32, 0
          %s503 = scalar_select %p502, %s32, 0
          %s504 = scalar_lea.vmem %s1, %s503
        $region20: #{tpu_custom_call.1} parent=11 // pred_fallthru
          _
        // Predicated region
        $region21: #{tpu_custom_call.1} parent=11 // pred_check
          %p505 = pneg %p113
        $region22: #{tpu_custom_call.1} parent=11 // pred_check_branch
          %507 = sbr.rel (%p505) target = $region24
        $region23: #{tpu_custom_call.1} parent=11 // pred_region
          %p508 = scmp.lt.s32.totalorder %s32, 0
          %s509 = scalar_select %p508, %s32, 0
          %s510 = smul.addr %s509, 8
          %s511 = scalar_lea.vmem %s2, %s510
        $region24: #{tpu_custom_call.1} parent=11 // pred_fallthru
          _
        // Predicated region
        $region25: #{tpu_custom_call.1} parent=11 // pred_check
          %p512 = pneg %p139
        $region26: #{tpu_custom_call.1} parent=11 // pred_check_branch
          %514 = sbr.rel (%p512) target = $region28
        $region27: #{tpu_custom_call.1} parent=11 // pred_region
          %p515 = scmp.lt.s32.totalorder %s32, 0
          %s516 = scalar_select %p515, %s32, 0
          %s517 = smul.addr %s516, 8
          %s518 = scalar_lea.vmem %s3, %s517
        $region28: #{tpu_custom_call.1} parent=11 // pred_fallthru
          _
      $region12: #{tpu_custom_call.1} parent=5 // pred_fallthru
        _
      %p519 = scmp.lt.s32.totalorder %s23, 2
      // Predicated region
      $region29: #{tpu_custom_call.1} parent=5 // pred_check
        %p520 = pneg %p519
      $region30: #{tpu_custom_call.1} parent=5 // pred_check_branch
        %522 = sbr.rel (%p520) target = $region32
      $region31: #{tpu_custom_call.1} parent=5 // pred_region
        // Predicated region
        $region33: #{tpu_custom_call.1} parent=31 // pred_check
          %p523 = pneg %p159
        $region34: #{tpu_custom_call.1} parent=31 // pred_check_branch
          %525 = sbr.rel (%p523) target = $region36
        $region35: #{tpu_custom_call.1} parent=31 // pred_region
          %p526 = scmp.lt.s32.totalorder %s31, 1
          %s527 = scalar_select %p526, %s31, 1
          %s528 = scalar_lea.vmem %s4, %s527
        $region36: #{tpu_custom_call.1} parent=31 // pred_fallthru
          _
        // Predicated region
        $region37: #{tpu_custom_call.1} parent=31 // pred_check
          %p529 = pneg %p185
        $region38: #{tpu_custom_call.1} parent=31 // pred_check_branch
          %531 = sbr.rel (%p529) target = $region40
        $region39: #{tpu_custom_call.1} parent=31 // pred_region
          %p532 = scmp.lt.s32.totalorder %s31, 1
          %s533 = scalar_select %p532, %s31, 1
          %s534 = scalar_lea.vmem %s5, %s533
        $region40: #{tpu_custom_call.1} parent=31 // pred_fallthru
          _
        // Predicated region
        $region41: #{tpu_custom_call.1} parent=31 // pred_check
          %p535 = pneg %p211
        $region42: #{tpu_custom_call.1} parent=31 // pred_check_branch
          %537 = sbr.rel (%p535) target = $region44
        $region43: #{tpu_custom_call.1} parent=31 // pred_region
          %p538 = scmp.lt.s32.totalorder %s31, 1
          %s539 = scalar_select %p538, %s31, 1
          %s540 = smul.addr %s539, 4
          %s541 = smul.addr %s540, 4
          %s542 = scalar_lea.vmem %s6, %s541
        $region44: #{tpu_custom_call.1} parent=31 // pred_fallthru
          _
        // Predicated region
        $region45: #{tpu_custom_call.1} parent=31 // pred_check
          %p543 = pneg %p237
        $region46: #{tpu_custom_call.1} parent=31 // pred_check_branch
          %545 = sbr.rel (%p543) target = $region48
        $region47: #{tpu_custom_call.1} parent=31 // pred_region
          %p546 = scmp.lt.s32.totalorder %s31, 1
          %s547 = scalar_select %p546, %s31, 1
          %s548 = scalar_lea.vmem %s7, %s547
        $region48: #{tpu_custom_call.1} parent=31 // pred_fallthru
          _
        // Predicated region
        $region49: #{tpu_custom_call.1} parent=31 // pred_check
          %p549 = pneg %p263
        $region50: #{tpu_custom_call.1} parent=31 // pred_check_branch
          %551 = sbr.rel (%p549) target = $region52
        $region51: #{tpu_custom_call.1} parent=31 // pred_region
          %p552 = scmp.lt.s32.totalorder %s31, 1
          %s553 = scalar_select %p552, %s31, 1
          %s554 = smul.addr %s553, 4
          %s555 = smul.addr %s554, 4
          %s556 = scalar_lea.vmem %s8, %s555
        $region52: #{tpu_custom_call.1} parent=31 // pred_fallthru
          _
        // Predicated region
        $region53: #{tpu_custom_call.1} parent=31 // pred_check
          %p557 = pneg %p289
        $region54: #{tpu_custom_call.1} parent=31 // pred_check_branch
          %559 = sbr.rel (%p557) target = $region56
        $region55: #{tpu_custom_call.1} parent=31 // pred_region
          %p560 = scmp.lt.s32.totalorder %s31, 1
          %s561 = scalar_select %p560, %s31, 1
          %s562 = scalar_lea.vmem %s9, %s561
        $region56: #{tpu_custom_call.1} parent=31 // pred_fallthru
          _
        // Predicated region
        $region57: #{tpu_custom_call.1} parent=31 // pred_check
          %p563 = pneg %p315
        $region58: #{tpu_custom_call.1} parent=31 // pred_check_branch
          %565 = sbr.rel (%p563) target = $region60
        $region59: #{tpu_custom_call.1} parent=31 // pred_region
          %p566 = scmp.lt.s32.totalorder %s31, 1
          %s567 = scalar_select %p566, %s31, 1
          %s568 = scalar_lea.vmem %s10, %s567
        $region60: #{tpu_custom_call.1} parent=31 // pred_fallthru
          _
        // Predicated region
        $region61: #{tpu_custom_call.1} parent=31 // pred_check
          %p569 = pneg %p341
        $region62: #{tpu_custom_call.1} parent=31 // pred_check_branch
          %571 = sbr.rel (%p569) target = $region64
        $region63: #{tpu_custom_call.1} parent=31 // pred_region
          %p572 = scmp.lt.s32.totalorder %s31, 1
          %s573 = scalar_select %p572, %s31, 1
          %s574 = scalar_lea.vmem %s11, %s573
        $region64: #{tpu_custom_call.1} parent=31 // pred_fallthru
          _
        // Predicated region
        $region65: #{tpu_custom_call.1} parent=31 // pred_check
          %p575 = pneg %p367
        $region66: #{tpu_custom_call.1} parent=31 // pred_check_branch
          %577 = sbr.rel (%p575) target = $region68
        $region67: #{tpu_custom_call.1} parent=31 // pred_region
          %p578 = scmp.lt.s32.totalorder %s31, 1
          %s579 = scalar_select %p578, %s31, 1
          %s580 = smul.addr %s579, 12
          %s581 = smul.addr %s580, 4
          %s582 = scalar_lea.vmem %s12, %s581
        $region68: #{tpu_custom_call.1} parent=31 // pred_fallthru
          _
        // Predicated region
        $region69: #{tpu_custom_call.1} parent=31 // pred_check
          %p583 = pneg %p393
        $region70: #{tpu_custom_call.1} parent=31 // pred_check_branch
          %585 = sbr.rel (%p583) target = $region72
        $region71: #{tpu_custom_call.1} parent=31 // pred_region
          %p586 = scmp.lt.s32.totalorder %s31, 1
          %s587 = scalar_select %p586, %s31, 1
          %s588 = scalar_lea.vmem %s13, %s587
        $region72: #{tpu_custom_call.1} parent=31 // pred_fallthru
          _
        // Predicated region
        $region73: #{tpu_custom_call.1} parent=31 // pred_check
          %p589 = pneg %p419
        $region74: #{tpu_custom_call.1} parent=31 // pred_check_branch
          %591 = sbr.rel (%p589) target = $region76
        $region75: #{tpu_custom_call.1} parent=31 // pred_region
          %p592 = scmp.lt.s32.totalorder %s31, 1
          %s593 = scalar_select %p592, %s31, 1
          %s594 = smul.addr %s593, 24
          %s595 = smul.addr %s594, 4
          %s596 = scalar_lea.vmem %s14, %s595
        $region76: #{tpu_custom_call.1} parent=31 // pred_fallthru
          _
        // Predicated region
        $region77: #{tpu_custom_call.1} parent=31 // pred_check
          %p597 = pneg %p445
        $region78: #{tpu_custom_call.1} parent=31 // pred_check_branch
          %599 = sbr.rel (%p597) target = $region80
        $region79: #{tpu_custom_call.1} parent=31 // pred_region
          %p600 = scmp.lt.s32.totalorder %s31, 1
          %s601 = scalar_select %p600, %s31, 1
          %s602 = scalar_lea.vmem %s15, %s601
        $region80: #{tpu_custom_call.1} parent=31 // pred_fallthru
          _
      $region32: #{tpu_custom_call.1} parent=5 // pred_fallthru
        _
      %p603 = scmp.le.s32.totalorder 1, %s23
      %p604 = scmp.lt.s32.totalorder %s23, 3
      %p605 = pnand %p603, %p604
      %p606 = pneg %p605
      // Predicated region
      $region81: #{tpu_custom_call.1} parent=5 // pred_check
        _
      $region82: #{tpu_custom_call.1} parent=5 // pred_check_branch
        %608 = sbr.rel (%p605) target = $region84
      $region83: #{tpu_custom_call.1} parent=5 // pred_region
        %s609 = ssub.s32 %s23, 1
        %p610 = scmp.lt.s32.totalorder %s32, 0
        %s611 = scalar_select %p610, %s32, 0
        %s612 = smul.addr %s611, 8
        %s613 = scalar_lea.vmem %s0, %s612
        %p614 = pneg %p61
        %p615 = pneg %p58
        %p616 = scmp.lt.s32.totalorder %s32, 0
        %s617 = scalar_select %p616, %s32, 0
        %s618 = scalar_lea.vmem %s1, %s617
        %p619 = pneg %p87
        %p620 = pneg %p84
        %p621 = scmp.lt.s32.totalorder %s32, 0
        %s622 = scalar_select %p621, %s32, 0
        %s623 = smul.addr %s622, 8
        %s624 = scalar_lea.vmem %s2, %s623
        %p625 = pneg %p113
        %p626 = pneg %p110
        %p627 = scmp.lt.s32.totalorder %s32, 0
        %s628 = scalar_select %p627, %s32, 0
        %s629 = smul.addr %s628, 8
        %s630 = scalar_lea.vmem %s3, %s629
        %p631 = pneg %p139
        %p632 = pneg %p136
        %p633 = scmp.lt.s32.totalorder %s33, 1
        %s634 = scalar_select %p633, %s33, 1
        %s635 = scalar_lea.vmem %s4, %s634
        %p636 = pneg %p165
        %p637 = pneg %p162
        %p638 = scmp.lt.s32.totalorder %s33, 1
        %s639 = scalar_select %p638, %s33, 1
        %s640 = scalar_lea.vmem %s5, %s639
        %p641 = pneg %p191
        %p642 = pneg %p188
        %p643 = scmp.lt.s32.totalorder %s33, 1
        %s644 = scalar_select %p643, %s33, 1
        %s645 = smul.addr %s644, 4
        %s646 = smul.addr %s645, 4
        %s647 = scalar_lea.vmem %s6, %s646
        %p648 = pneg %p217
        %p649 = pneg %p214
        %p650 = scmp.lt.s32.totalorder %s33, 1
        %s651 = scalar_select %p650, %s33, 1
        %s652 = scalar_lea.vmem %s7, %s651
        %p653 = pneg %p243
        %p654 = pneg %p240
        %p655 = scmp.lt.s32.totalorder %s33, 1
        %s656 = scalar_select %p655, %s33, 1
        %s657 = smul.addr %s656, 4
        %s658 = smul.addr %s657, 4
        %s659 = scalar_lea.vmem %s8, %s658
        %p660 = pneg %p269
        %p661 = pneg %p266
        %p662 = scmp.lt.s32.totalorder %s33, 1
        %s663 = scalar_select %p662, %s33, 1
        %s664 = scalar_lea.vmem %s9, %s663
        %p665 = pneg %p295
        %p666 = pneg %p292
        %p667 = scmp.lt.s32.totalorder %s33, 1
        %s668 = scalar_select %p667, %s33, 1
        %s669 = scalar_lea.vmem %s10, %s668
        %p670 = pneg %p321
        %p671 = pneg %p318
        %p672 = scmp.lt.s32.totalorder %s33, 1
        %s673 = scalar_select %p672, %s33, 1
        %s674 = scalar_lea.vmem %s11, %s673
        %p675 = pneg %p347
        %p676 = pneg %p344
        %p677 = scmp.lt.s32.totalorder %s33, 1
        %s678 = scalar_select %p677, %s33, 1
        %s679 = smul.addr %s678, 12
        %s680 = smul.addr %s679, 4
        %s681 = scalar_lea.vmem %s12, %s680
        %p682 = pneg %p373
        %p683 = pneg %p370
        %p684 = scmp.lt.s32.totalorder %s33, 1
        %s685 = scalar_select %p684, %s33, 1
        %s686 = scalar_lea.vmem %s13, %s685
        %p687 = pneg %p399
        %p688 = pneg %p396
        %p689 = scmp.lt.s32.totalorder %s33, 1
        %s690 = scalar_select %p689, %s33, 1
        %s691 = smul.addr %s690, 24
        %s692 = smul.addr %s691, 4
        %s693 = scalar_lea.vmem %s14, %s692
        %p694 = pneg %p425
        %p695 = pneg %p422
        %p696 = scmp.lt.s32.totalorder %s33, 1
        %s697 = scalar_select %p696, %s33, 1
        %s698 = scalar_lea.vmem %s15, %s697
        %p699 = pneg %p451
        %p700 = pneg %p448
        %p701 = pneg %p477
        %p702 = pneg %p474
        %p703 = scmp.lt.s32.totalorder %s32, 0
        %s704 = scalar_select %p703, %s32, 0
        %s705 = smul.addr %s704, 8
        %s706 = scalar_lea.vmem %s0, %s705
        %p707 = scmp.lt.s32.totalorder %s32, 0
        %s708 = scalar_select %p707, %s32, 0
        %s709 = scalar_lea.vmem %s1, %s708
        %p710 = scmp.lt.s32.totalorder %s32, 0
        %s711 = scalar_select %p710, %s32, 0
        %s712 = smul.addr %s711, 8
        %s713 = scalar_lea.vmem %s2, %s712
        %p714 = scmp.lt.s32.totalorder %s32, 0
        %s715 = scalar_select %p714, %s32, 0
        %s716 = smul.addr %s715, 8
        %s717 = scalar_lea.vmem %s3, %s716
        %p718 = scmp.lt.s32.totalorder %s33, 1
        %s719 = scalar_select %p718, %s33, 1
        %s720 = scalar_lea.vmem %s4, %s719
        %p721 = scmp.lt.s32.totalorder %s33, 1
        %s722 = scalar_select %p721, %s33, 1
        %s723 = scalar_lea.vmem %s5, %s722
        %p724 = scmp.lt.s32.totalorder %s33, 1
        %s725 = scalar_select %p724, %s33, 1
        %s726 = smul.addr %s725, 4
        %s727 = smul.addr %s726, 4
        %s728 = scalar_lea.vmem %s6, %s727
        %p729 = scmp.lt.s32.totalorder %s33, 1
        %s730 = scalar_select %p729, %s33, 1
        %s731 = scalar_lea.vmem %s7, %s730
        %p732 = scmp.lt.s32.totalorder %s33, 1
        %s733 = scalar_select %p732, %s33, 1
        %s734 = smul.addr %s733, 4
        %s735 = smul.addr %s734, 4
        %s736 = scalar_lea.vmem %s8, %s735
        %p737 = scmp.lt.s32.totalorder %s33, 1
        %s738 = scalar_select %p737, %s33, 1
        %s739 = scalar_lea.vmem %s9, %s738
        %p740 = scmp.lt.s32.totalorder %s33, 1
        %s741 = scalar_select %p740, %s33, 1
        %s742 = scalar_lea.vmem %s10, %s741
        %p743 = scmp.lt.s32.totalorder %s33, 1
        %s744 = scalar_select %p743, %s33, 1
        %s745 = scalar_lea.vmem %s11, %s744
        %p746 = scmp.lt.s32.totalorder %s33, 1
        %s747 = scalar_select %p746, %s33, 1
        %s748 = smul.addr %s747, 12
        %s749 = smul.addr %s748, 4
        %s750 = scalar_lea.vmem %s12, %s749
        %p751 = scmp.lt.s32.totalorder %s33, 1
        %s752 = scalar_select %p751, %s33, 1
        %s753 = scalar_lea.vmem %s13, %s752
        %p754 = scmp.lt.s32.totalorder %s33, 1
        %s755 = scalar_select %p754, %s33, 1
        %s756 = smul.addr %s755, 24
        %s757 = smul.addr %s756, 4
        %s758 = scalar_lea.vmem %s14, %s757
        %p759 = scmp.lt.s32.totalorder %s33, 1
        %s760 = scalar_select %p759, %s33, 1
        %s761 = scalar_lea.vmem %s15, %s760
        %p763 = scmp.eq.s32.totalorder %s33, 0
        // Predicated region
        $region85: #{tpu_custom_call.1} parent=83 // pred_check
          %p764 = pneg %p763
        $region86: #{tpu_custom_call.1} parent=83 // pred_check_branch
          %766 = sbr.rel (%p764) target = $region88
        $region87: #{tpu_custom_call.1} parent=83 // pred_region
          %v767 = vld [vmem:[%s713] sm:$0xff]
          %v768 = vld [vmem:[%s717] sm:$0xff]
          %v769 = vadd.f32 %v767, %v768
          %vm770 = vcmask 261120
          %771 = vst.msk [vmem:[#allocation2] sm:$0xff] %vm770, %v769
        $region88: #{tpu_custom_call.1} parent=83 // pred_fallthru
          _
        %v772 = vld [vmem:[#allocation2] sm:$0xff]
        %v773 = vld [vmem:[%s706] sm:$0xff]
        %v774 = vld [vmem:[%s709] sm:$0x1]
        %vm775 = vcmp.lt.f32.partialorder %v774, 0.5
        %v776 = vld [vmem:[%s720] sm:$0x1]
        %v777 = vld [vmem:[%s723] sm:$0x1]
        %vm778 = vcmask 261120
        %v779 = vsel %vm778, %v772, 0.0
        %780 = vadd.xlane.f32.xlu0 %v779
        %v781 = vpop.xlane.xlu0 %780
        %v782 = vrcp.pop 32.0
        %v783 = vmul.f32 32.0, %v782
        %v784 = vsub.f32 1.0, %v783
        %v785 = vmul.f32 %v782, %v784
        %v786 = vadd.f32 %v782, %v785
        %vm787 = vweird.f32 %v782
        %v788 = vsel %vm787, %v782, %v786
        %v789 = vmul.f32 %v781, %v788
        %v790 = vsub.f32 %v772, %v789
        %v791 = vmul.f32 %v790, %v790
        %v792 = vsel %vm778, %v791, 0.0
        %793 = vadd.xlane.f32.xlu0 %v792
        %v794 = vpop.xlane.xlu0 %793
        %v795 = vmul.f32 %v794, %v788
        %v796 = vadd.f32 %v795, 1e-05
        %v797 = vrsqrt.pop %v796
        %v798 = vmul.f32 %v797, %v796
        %v799 = vmul.f32 %v798, %v797
        %v800 = vmul.f32 0.5, %v799
        %v801 = vsub.f32 1.5, %v800
        %v802 = vmul.f32 %v797, %v801
        %vm803 = vweird.f32 %v796
        %vm804 = vweird.f32 %v797
        %vm805 = vmor %vm803, %vm804
        %v806 = vsel %vm805, %v797, %v802
        %v807 = vmul.f32 %v790, %v806
        %v809 = vperm.slane %v776, 0
        %v811 = vmul.f32 %v807, %v809
        %v813 = vperm.slane %v777, 0
        %v815 = vadd.f32 %v811, %v813
        %v816 = vpack.c.bf16 %v815, %v815
        %v817 = vld [vmem:[%s728] sm:$0xf]
        %v818 = vld [vmem:[%s728 + $0x4] sm:$0xf]
        %v819 = vld [vmem:[%s728 + $0x8] sm:$0xf]
        %v820 = vld [vmem:[%s728 + $0xc] sm:$0xf]
        %v821 = vld [vmem:[%s731] sm:$0x1]
        %v823 = vperm.slane %v821, 0
        %v829 = vunpack.c.l.b16 %v817
        %v830 = vunpack.c.l.b16 %v818
        %v831 = vunpack.c.l.b16 %v819
        %v832 = vunpack.c.l.b16 %v820
        %v833 = vpack.c.b16 %v830, %v829
        %v834 = vpack.c.b16 %v832, %v831
        %v838 = vsel %vm778, %v816, 0
        %840 = vmatpush.bf16.msra.mxu0 0
        %841 = vmatpush.bf16.msra.mxu0 0
        %842 = vmatpush.bf16.msra.mxu0 0
        %843 = vmatpush.bf16.msra.mxu0 0
        %844 = vmatpush.bf16.msra.mxu0 0
        %845 = vmatpush.bf16.msra.mxu0 0
        %846 = vmatpush.bf16.msra.mxu0 %v834
        %847 = vmatpush.bf16.msra.mxu0 %v833
        %848 = vmatmul.bf16.gmra.mxu0 %v838
        %v849 = vpop.f32.mrf.mxu0
        %v850 = vadd.f32 %v823, %v849
        %v851 = vpop.f32.mrf.mxu0
        %852 = vdwg.mxu0
        %v853 = vpack.c.bf16 %v850, %v850
        %855 = vrot.lane.b32.xlu0 %v853, 112
        %v856 = vpop.permute.xlu0 %855
        %v857 = vunpack.c.l.b16 %v853
        %v858 = vpack.c.b16 %v857, %v857
        %859 = vrot.lane.b32.xlu0 %v858, 96
        %v860 = vpop.permute.xlu0 %859
        %vm861 = vcmask 130048
        %v863 = vsel %vm861, %v853, 0
        %v866 = vsel %vm861, %v860, 0
        %868 = vmatpush.bf16.xpose.msra.mxu0 0
        %869 = vmatpush.bf16.xpose.msra.mxu0 0
        %870 = vmatpush.bf16.xpose.msra.mxu0 0
        %871 = vmatpush.bf16.xpose.msra.mxu0 0
        %872 = vmatpush.bf16.xpose.msra.mxu0 0
        %873 = vmatpush.bf16.xpose.msra.mxu0 0
        %874 = vmatpush.bf16.xpose.msra.mxu0 0
        %875 = vmatpush.bf16.xpose.msra.mxu0 %v866
        %876 = vmatmul.bf16.gmra.mxu0 %v863
        %v877 = vpop.f32.mrf.mxu0
        %v878 = vadd.f32 0.0, %v877
        %v879 = vpop.f32.mrf.mxu0
        %880 = vdwg.mxu0
        %v881 = vunpack.c.l.b16 %v856
        %v882 = vpack.c.b16 %v881, %v881
        %883 = vrot.lane.b32.xlu0 %v882, 96
        %v884 = vpop.permute.xlu0 %883
        %v886 = vsel %vm861, %v856, 0
        %v889 = vsel %vm861, %v884, 0
        %891 = vmatpush.bf16.xpose.msra.mxu0 0
        %892 = vmatpush.bf16.xpose.msra.mxu0 0
        %893 = vmatpush.bf16.xpose.msra.mxu0 0
        %894 = vmatpush.bf16.xpose.msra.mxu0 0
        %895 = vmatpush.bf16.xpose.msra.mxu0 0
        %896 = vmatpush.bf16.xpose.msra.mxu0 0
        %897 = vmatpush.bf16.xpose.msra.mxu0 0
        %898 = vmatpush.bf16.xpose.msra.mxu0 %v889
        %899 = vmatmul.bf16.gmra.mxu0 %v886
        %v900 = vpop.f32.mrf.mxu0
        %v901 = vadd.f32 0.0, %v900
        %v902 = vpop.f32.mrf.mxu0
        %903 = vdwg.mxu0
        %v904 = vsel %vm775, 1, 0
        %v905 = vperm.slane %v904, 0
        %vm906 = vcmp.eq.s32.totalorder %v905, 1
        %v907 = vsel %vm906, -1e+09, %v878
        %v908 = vsel %vm906, -1e+09, %v901
        %vm909 = vcmask 64512
        %v910 = vsel %vm909, %v907, -inf
        %911 = vmax.xlane.f32.xlu0 %v910
        %v912 = vpop.xlane.xlu0 %911
        %v913 = vsel %vm909, %v908, -inf
        %914 = vmax.xlane.f32.xlu0 %v913
        %v915 = vpop.xlane.xlu0 %914
        %v916 = vsub.f32 -inf, %v912
        %v917 = vsub.f32 -inf, %v915
        %v918 = vmul.f32 %v916, 1.442695
        %v919 = vpow.pop %v918
        %v920 = vmul.f32 %v917, 1.442695
        %v921 = vpow.pop %v920
        %v922 = vsub.f32 %v907, %v912
        %v923 = vsub.f32 %v908, %v915
        %v924 = vmul.f32 %v922, 1.442695
        %v925 = vpow.pop %v924
        %v926 = vmul.f32 %v923, 1.442695
        %v927 = vpow.pop %v926
        %v928 = vmul.f32 %v919, 0.0
        %v929 = vmul.f32 %v921, 0.0
        %v930 = vsel %vm909, %v925, 0.0
        %931 = vadd.xlane.f32.xlu0 %v930
        %v932 = vpop.xlane.xlu0 %931
        %v933 = vsel %vm909, %v927, 0.0
        %934 = vadd.xlane.f32.xlu0 %v933
        %v935 = vpop.xlane.xlu0 %934
        %v936 = vadd.f32 %v928, %v932
        %v937 = vadd.f32 %v929, %v935
        %v938 = vpack.c.bf16 %v925, %v925
        %v939 = vpack.c.bf16 %v927, %v927
        %940 = vrot.lane.b32.xlu0 %v858, 64
        %v941 = vpop.permute.xlu0 %940
        %v943 = vsel %vm909, %v938, 0
        %vm945 = vcmask 1043456
        %v947 = vsel %vm945, %v941, 0
        %949 = vmatpush.bf16.msra.mxu0 0
        %950 = vmatpush.bf16.msra.mxu0 0
        %951 = vmatpush.bf16.msra.mxu0 0
        %952 = vmatpush.bf16.msra.mxu0 0
        %953 = vmatpush.bf16.msra.mxu0 0
        %954 = vmatpush.bf16.msra.mxu0 0
        %955 = vmatpush.bf16.msra.mxu0 0
        %956 = vmatpush.bf16.msra.mxu0 %v947
        %957 = vmatmul.bf16.gmra.mxu0 %v943
        %v958 = vpop.f32.mrf.mxu0
        %v959 = vadd.f32 0.0, %v958
        %v960 = vpop.f32.mrf.mxu0
        %961 = vdwg.mxu0
        %962 = vrot.lane.b32.xlu0 %v882, 64
        %v963 = vpop.permute.xlu0 %962
        %v965 = vsel %vm909, %v939, 0
        %v968 = vsel %vm945, %v963, 0
        %970 = vmatpush.bf16.msra.mxu0 0
        %971 = vmatpush.bf16.msra.mxu0 0
        %972 = vmatpush.bf16.msra.mxu0 0
        %973 = vmatpush.bf16.msra.mxu0 0
        %974 = vmatpush.bf16.msra.mxu0 0
        %975 = vmatpush.bf16.msra.mxu0 0
        %976 = vmatpush.bf16.msra.mxu0 0
        %977 = vmatpush.bf16.msra.mxu0 %v968
        %978 = vmatmul.bf16.gmra.mxu0 %v965
        %v979 = vpop.f32.mrf.mxu0
        %v980 = vadd.f32 0.0, %v979
        %v981 = vpop.f32.mrf.mxu0
        %982 = vdwg.mxu0
        %v983 = vadd.f32 %v928, %v959
        %v984 = vadd.f32 %v929, %v980
        %v985 = vrcp.pop %v936
        %v986 = vrcp.pop %v937
        %v987 = vmul.f32 %v983, %v985
        %v988 = vmul.f32 %v984, %v986
        %990 = vrot.lane.b32.xlu0 %v988, 16
        %v991 = vpop.permute.xlu0 %990
        %v993 = vsel %vm861, %v987, %v991
        %v994 = vpack.c.bf16 %v993, %v993
        %v995 = vld [vmem:[%s736] sm:$0xf]
        %v996 = vld [vmem:[%s736 + $0x4] sm:$0xf]
        %v997 = vld [vmem:[%s736 + $0x8] sm:$0xf]
        %v998 = vld [vmem:[%s736 + $0xc] sm:$0xf]
        %v999 = vld [vmem:[%s739] sm:$0x1]
        %v1001 = vperm.slane %v999, 0
        %v1007 = vunpack.c.l.b16 %v995
        %v1008 = vunpack.c.l.b16 %v996
        %v1009 = vunpack.c.l.b16 %v997
        %v1010 = vunpack.c.l.b16 %v998
        %v1011 = vpack.c.b16 %v1008, %v1007
        %v1012 = vpack.c.b16 %v1010, %v1009
        %v1016 = vsel %vm778, %v994, 0
        %1018 = vmatpush.bf16.msra.mxu0 0
        %1019 = vmatpush.bf16.msra.mxu0 0
        %1020 = vmatpush.bf16.msra.mxu0 0
        %1021 = vmatpush.bf16.msra.mxu0 0
        %1022 = vmatpush.bf16.msra.mxu0 0
        %1023 = vmatpush.bf16.msra.mxu0 0
        %1024 = vmatpush.bf16.msra.mxu0 %v1012
        %1025 = vmatpush.bf16.msra.mxu0 %v1011
        %1026 = vmatmul.bf16.gmra.mxu0 %v1016
        %v1027 = vpop.f32.mrf.mxu0
        %v1028 = vadd.f32 %v1001, %v1027
        %v1029 = vpop.f32.mrf.mxu0
        %1030 = vdwg.mxu0
        %v1031 = vadd.f32 %v772, %v1028
        %v1032 = vld [vmem:[%s742] sm:$0x1]
        %v1033 = vld [vmem:[%s745] sm:$0x1]
        %v1034 = vsel %vm778, %v1031, 0.0
        %1035 = vadd.xlane.f32.xlu0 %v1034
        %v1036 = vpop.xlane.xlu0 %1035
        %v1037 = vmul.f32 %v1036, %v788
        %v1038 = vsub.f32 %v1031, %v1037
        %v1039 = vmul.f32 %v1038, %v1038
        %v1040 = vsel %vm778, %v1039, 0.0
        %1041 = vadd.xlane.f32.xlu0 %v1040
        %v1042 = vpop.xlane.xlu0 %1041
        %v1043 = vmul.f32 %v1042, %v788
        %v1044 = vadd.f32 %v1043, 1e-05
        %v1045 = vrsqrt.pop %v1044
        %v1046 = vmul.f32 %v1045, %v1044
        %v1047 = vmul.f32 %v1046, %v1045
        %v1048 = vmul.f32 0.5, %v1047
        %v1049 = vsub.f32 1.5, %v1048
        %v1050 = vmul.f32 %v1045, %v1049
        %vm1051 = vweird.f32 %v1044
        %vm1052 = vweird.f32 %v1045
        %vm1053 = vmor %vm1051, %vm1052
        %v1054 = vsel %vm1053, %v1045, %v1050
        %v1055 = vmul.f32 %v1038, %v1054
        %v1057 = vperm.slane %v1032, 0
        %v1059 = vmul.f32 %v1055, %v1057
        %v1061 = vperm.slane %v1033, 0
        %v1063 = vadd.f32 %v1059, %v1061
        %1065 = vset.pattern.permute.xlu0 0
        %1066 = vperm.xlu0 %1065, %v773
        %v1067 = vpop.permute.xlu0 %1066
        %v1069 = vmul.f32 %v1063, %v1067
        %v1070 = vld [vmem:[%s753] sm:$0x1]
        %v1071 = vlaneseq
        %v1072 = vshrl.u32 %v1071, 7
        %v1073 = vrot.slane %v1069, 7
        %vm1074 = vcmp.lt.s32.totalorder %v1072, 1
        %v1075 = vsel %vm1074, 1, 0
        %vm1076 = vcmp.eq.s32.totalorder %v1075, 1
        %v1077 = vsel %vm1076, 0.0, %v1073
        %v1078 = vrot.slane %v1069, 1
        %vm1079 = vcmp.ge.s32.totalorder %v1072, 7
        %v1080 = vsel %vm1079, 1, 0
        %vm1081 = vcmp.eq.s32.totalorder %v1080, 1
        %v1082 = vsel %vm1081, 0.0, %v1078
        %1084 = vrot.lane.b32.xlu0 %v1069, 32
        %v1085 = vpop.permute.xlu0 %1084
        %1088 = vrot.lane.b32.xlu0 %v1082, 64
        %v1089 = vpop.permute.xlu0 %1088
        %v1091 = vsel %vm778, %v1077, %v1085
        %vm1092 = vcmask 523264
        %v1093 = vsel %vm1092, %v1091, %v1089
        %v1094 = vpack.c.bf16 %v1093, %v1093
        %v1095 = vld [vmem:[%s750] sm:$0xf]
        %v1096 = vld [vmem:[%s750 + $0x4] sm:$0xf]
        %v1097 = vld [vmem:[%s750 + $0x8] sm:$0xf]
        %v1098 = vld [vmem:[%s750 + $0xc] sm:$0xf]
        %v1099 = vld [vmem:[%s750 + $0x10] sm:$0xf]
        %v1100 = vld [vmem:[%s750 + $0x14] sm:$0xf]
        %v1101 = vld [vmem:[%s750 + $0x18] sm:$0xf]
        %v1102 = vld [vmem:[%s750 + $0x1c] sm:$0xf]
        %v1103 = vld [vmem:[%s750 + $0x20] sm:$0xf]
        %v1104 = vld [vmem:[%s750 + $0x24] sm:$0xf]
        %v1105 = vld [vmem:[%s750 + $0x28] sm:$0xf]
        %v1106 = vld [vmem:[%s750 + $0x2c] sm:$0xf]
        %v1108 = vperm.slane %v1070, 0
        %v1122 = vunpack.c.l.b16 %v1095
        %v1123 = vunpack.c.l.b16 %v1096
        %v1124 = vunpack.c.l.b16 %v1097
        %v1125 = vunpack.c.l.b16 %v1098
        %v1126 = vunpack.c.l.b16 %v1099
        %v1127 = vunpack.c.l.b16 %v1100
        %v1128 = vunpack.c.l.b16 %v1101
        %v1129 = vunpack.c.l.b16 %v1102
        %v1130 = vunpack.c.l.b16 %v1103
        %v1131 = vunpack.c.l.b16 %v1104
        %v1132 = vunpack.c.l.b16 %v1105
        %v1133 = vunpack.c.l.b16 %v1106
        %v1134 = vpack.c.b16 %v1123, %v1122
        %v1135 = vpack.c.b16 %v1125, %v1124
        %v1136 = vpack.c.b16 %v1127, %v1126
        %v1137 = vpack.c.b16 %v1129, %v1128
        %v1138 = vpack.c.b16 %v1131, %v1130
        %v1139 = vpack.c.b16 %v1133, %v1132
        %vm1146 = vcmask 785408
        %v1148 = vsel %vm1146, %v1094, 0
        %1150 = vmatpush.bf16.msra.mxu0 0
        %1151 = vmatpush.bf16.msra.mxu0 0
        %1152 = vmatpush.bf16.msra.mxu0 %v1139
        %1153 = vmatpush.bf16.msra.mxu0 %v1138
        %1154 = vmatpush.bf16.msra.mxu0 %v1137
        %1155 = vmatpush.bf16.msra.mxu0 %v1136
        %1156 = vmatpush.bf16.msra.mxu0 %v1135
        %1157 = vmatpush.bf16.msra.mxu0 %v1134
        %1158 = vmatmul.bf16.gmra.mxu0 %v1148
        %v1159 = vpop.f32.mrf.mxu0
        %v1160 = vadd.f32 %v1108, %v1159
        %v1161 = vpop.f32.mrf.mxu0
        %1162 = vdwg.mxu0
        %v1163 = vmax.f32 %v1160, 0.0
        %v1164 = vld [vmem:[%s761] sm:$0x1]
        %v1165 = vrot.slane %v1163, 7
        %v1166 = vsel %vm1076, 0.0, %v1165
        %v1167 = vrot.slane %v1163, 1
        %v1168 = vsel %vm1081, 0.0, %v1167
        %1170 = vrot.lane.b32.xlu0 %v1163, 64
        %v1171 = vpop.permute.xlu0 %1170
        %v1173 = vsel %vm1092, %v1166, %v1171
        %v1174 = vpack.c.bf16 %v1173, %v1173
        %v1175 = vpack.c.bf16 %v1168, %v1168
        %v1176 = vld [vmem:[%s758] sm:$0xf]
        %v1177 = vld [vmem:[%s758 + $0x4] sm:$0xf]
        %v1178 = vld [vmem:[%s758 + $0x8] sm:$0xf]
        %v1179 = vld [vmem:[%s758 + $0xc] sm:$0xf]
        %v1180 = vld [vmem:[%s758 + $0x10] sm:$0xf]
        %v1181 = vld [vmem:[%s758 + $0x14] sm:$0xf]
        %v1182 = vld [vmem:[%s758 + $0x18] sm:$0xf]
        %v1183 = vld [vmem:[%s758 + $0x1c] sm:$0xf]
        %v1184 = vld [vmem:[%s758 + $0x20] sm:$0xf]
        %v1185 = vld [vmem:[%s758 + $0x24] sm:$0xf]
        %v1186 = vld [vmem:[%s758 + $0x28] sm:$0xf]
        %v1187 = vld [vmem:[%s758 + $0x2c] sm:$0xf]
        %v1188 = vld [vmem:[%s758 + $0x30] sm:$0xf]
        %v1189 = vld [vmem:[%s758 + $0x34] sm:$0xf]
        %v1190 = vld [vmem:[%s758 + $0x38] sm:$0xf]
        %v1191 = vld [vmem:[%s758 + $0x3c] sm:$0xf]
        %v1192 = vld [vmem:[%s758 + $0x40] sm:$0xf]
        %v1193 = vld [vmem:[%s758 + $0x44] sm:$0xf]
        %v1194 = vld [vmem:[%s758 + $0x48] sm:$0xf]
        %v1195 = vld [vmem:[%s758 + $0x4c] sm:$0xf]
        %v1196 = vld [vmem:[%s758 + $0x50] sm:$0xf]
        %v1197 = vld [vmem:[%s758 + $0x54] sm:$0xf]
        %v1198 = vld [vmem:[%s758 + $0x58] sm:$0xf]
        %v1199 = vld [vmem:[%s758 + $0x5c] sm:$0xf]
        %v1201 = vperm.slane %v1164, 0
        %v1227 = vunpack.c.l.b16 %v1176
        %v1228 = vunpack.c.l.b16 %v1177
        %v1229 = vunpack.c.l.b16 %v1178
        %v1230 = vunpack.c.l.b16 %v1179
        %v1231 = vunpack.c.l.b16 %v1180
        %v1232 = vunpack.c.l.b16 %v1181
        %v1233 = vunpack.c.l.b16 %v1182
        %v1234 = vunpack.c.l.b16 %v1183
        %v1235 = vunpack.c.l.b16 %v1184
        %v1236 = vunpack.c.l.b16 %v1185
        %v1237 = vunpack.c.l.b16 %v1186
        %v1238 = vunpack.c.l.b16 %v1187
        %v1239 = vunpack.c.l.b16 %v1188
        %v1240 = vunpack.c.l.b16 %v1189
        %v1241 = vunpack.c.l.b16 %v1190
        %v1242 = vunpack.c.l.b16 %v1191
        %v1243 = vunpack.c.l.b16 %v1192
        %v1244 = vunpack.c.l.b16 %v1193
        %v1245 = vunpack.c.l.b16 %v1194
        %v1246 = vunpack.c.l.b16 %v1195
        %v1247 = vunpack.c.l.b16 %v1196
        %v1248 = vunpack.c.l.b16 %v1197
        %v1249 = vunpack.c.l.b16 %v1198
        %v1250 = vunpack.c.l.b16 %v1199
        %v1251 = vpack.c.b16 %v1228, %v1227
        %v1252 = vpack.c.b16 %v1230, %v1229
        %v1253 = vpack.c.b16 %v1232, %v1231
        %v1254 = vpack.c.b16 %v1234, %v1233
        %v1255 = vpack.c.b16 %v1236, %v1235
        %v1256 = vpack.c.b16 %v1238, %v1237
        %v1257 = vpack.c.b16 %v1240, %v1239
        %v1258 = vpack.c.b16 %v1242, %v1241
        %v1259 = vpack.c.b16 %v1244, %v1243
        %v1260 = vpack.c.b16 %v1246, %v1245
        %v1261 = vpack.c.b16 %v1248, %v1247
        %v1262 = vpack.c.b16 %v1250, %v1249
        %v1276 = vsel %vm1092, %v1175, 0
        %1278 = vmatpush.bf16.msra.mxu0 %v1258
        %1279 = vmatpush.bf16.msra.mxu0 %v1257
        %1280 = vmatpush.bf16.msra.mxu0 %v1256
        %1281 = vmatpush.bf16.msra.mxu0 %v1255
        %1282 = vmatpush.bf16.msra.mxu0 %v1254
        %1283 = vmatpush.bf16.msra.mxu0 %v1253
        %1284 = vmatpush.bf16.msra.mxu0 %v1252
        %1285 = vmatpush.bf16.msra.mxu0 %v1251
        %1286 = vmatmul.bf16.gmra.mxu0 %v1174
        %v1287 = vpop.f32.mrf.mxu0
        %v1288 = vadd.f32 %v1201, %v1287
        %v1289 = vpop.f32.mrf.mxu0
        %1290 = vdwg.mxu0
        %1291 = vmatpush.bf16.msra.mxu0 0
        %1292 = vmatpush.bf16.msra.mxu0 0
        %1293 = vmatpush.bf16.msra.mxu0 0
        %1294 = vmatpush.bf16.msra.mxu0 0
        %1295 = vmatpush.bf16.msra.mxu0 %v1262
        %1296 = vmatpush.bf16.msra.mxu0 %v1261
        %1297 = vmatpush.bf16.msra.mxu0 %v1260
        %1298 = vmatpush.bf16.msra.mxu0 %v1259
        %1299 = vmatmul.bf16.gmra.mxu0 %v1276
        %v1300 = vpop.f32.mrf.mxu0
        %v1301 = vadd.f32 %v1288, %v1300
        %v1302 = vpop.f32.mrf.mxu0
        %1303 = vdwg.mxu0
        %v1304 = vadd.f32 %v1301, %v1031
        %v1305 = vmul.f32 %v1304, %v1067
        %1306 = vst.msk [vmem:[#allocation2] sm:$0xff] %vm778, %v1305
        %p1307 = scmp.eq.s32.totalorder %s33, 1
        // Predicated region
        $region89: #{tpu_custom_call.1} parent=83 // pred_check
          %p1308 = pneg %p1307
        $region90: #{tpu_custom_call.1} parent=83 // pred_check_branch
          %1310 = sbr.rel (%p1308) target = $region92
        $region91: #{tpu_custom_call.1} parent=83 // pred_region
          %v1311 = vld [vmem:[#allocation2] sm:$0xff]
          %1312 = vst.msk [vmem:[#allocation3] sm:$0xff] %vm778, %v1311
        $region92: #{tpu_custom_call.1} parent=83 // pred_fallthru
          _
        // Predicated region
        $region93: #{tpu_custom_call.1} parent=83 // pred_check
          %p1313 = pneg %p474
        $region94: #{tpu_custom_call.1} parent=83 // pred_check_branch
          %1315 = sbr.rel (%p1313) target = $region96
        $region95: #{tpu_custom_call.1} parent=83 // pred_region
          %1317 = vsyncadd [#allocation4], 0
          %s1318 = smul.addr %s32, 8
          %s1319 = scalar_lea.hbm %s16, %s1318
          %s1321 = sshll.u32 [#allocation3], 4
          %s1322 = int_to_ptr.vmem [resolvable:$true] %s1321
          %s1323 = sshll.u32 %s1319, 4
          %s1324 = int_to_ptr.hbm [resolvable:$true] %s1323
          %1326 = dma.vmem_to_hbm [thread:$0]  %s1322, 128, %s1324, [#allocation4]
        $region96: #{tpu_custom_call.1} parent=83 // pred_fallthru
          _
        // Predicated region
        $region97: #{tpu_custom_call.1} parent=83 // pred_check
          %p1327 = pneg %p474
        $region98: #{tpu_custom_call.1} parent=83 // pred_check_branch
          %1329 = sbr.rel (%p1327) target = $region100
        $region99: #{tpu_custom_call.1} parent=83 // pred_region
          %1331 = dma.done [#allocation4], 128
        $region100: #{tpu_custom_call.1} parent=83 // pred_fallthru
          _
      $region84: #{tpu_custom_call.1} parent=5 // pred_fallthru
        _
      %p1332 = scmp.le.s32.totalorder 2, %s23
      // Predicated region
      $region101: #{tpu_custom_call.1} parent=5 // pred_check
        %p1333 = pneg %p1332
      $region102: #{tpu_custom_call.1} parent=5 // pred_check_branch
        %1335 = sbr.rel (%p1333) target = $region104
      $region103: #{tpu_custom_call.1} parent=5 // pred_region
        %s1336 = ssub.s32 %s23, 2
      $region104: #{tpu_custom_call.1} parent=5 // pred_fallthru
        _
    $region6: #{tpu_custom_call.1} parent=1 // loop_footer
      %s27 = sadd.s32 1, %s23
    $region7: #{tpu_custom_call.1} parent=1 // loop_footer_branch
      %22 = sbr.rel target = $region3
    $region8: #{tpu_custom_call.1} parent=1 // loop_exit
      _
    %1337 = vsyncpa [#allocation4], 1
    %s1338 = scalar_lea.sflag [#allocation4], 1
    %1339 = vsyncpa %s1338, 1

</llo_original>
